<compile_context>
chip_gen: v7x
topology: tpu7x:2x2x1
jax: 0.10.0
libtpu: 0.0.40
codegen_flags: <defaults>
</compile_context>

<pallas_src>
import functools

import jax
import jax.numpy as jnp
import numpy as np
from jax.experimental import pallas as pl
from jax.experimental.pallas import tpu as pltpu

BN_EPS = 1e-5


def _conv_tile(x_ref, w_ref, t, th):
    """3x3 conv (input already halo-padded) for output rows [t*th, t*th+th).

    x_ref : (1, H+2, W+2, Cin) bf16 -- whole padded image, resident per batch item
    w_ref : (Cout, 9*Cin)      bf16 -- weights as one im2col matrix, k=(dy,dx,ci)
    returns (Cout, th*W) float32 (lane-dense conv tile, f32 MXU accumulation)
    """
    _, hp, wp, cin = x_ref.shape
    w = wp - 2

    row0 = pl.multiple_of(t * th, th)
    rows = x_ref[0, pl.ds(row0, th + 2), :, :]            # (th+2, W+2, Cin)

    # im2col: 9 shifted windows concatenated on the channel axis -> one matmul.
    pieces = [rows[dy:dy + th, dx:dx + w, :]
              for dy in range(3) for dx in range(3)]      # 9 x (th, W, Cin)
    patch = jnp.concatenate(pieces, axis=-1)              # (th, W, 9*Cin)
    patch = patch.reshape(th * w, 9 * cin)                # (th*W, 9*Cin), layout-preserving

    # (Cout, 9*Cin) . (th*W, 9*Cin)^T -> (Cout, th*W), single K=9*Cin contraction.
    return jax.lax.dot_general(
        w_ref[...], patch,
        dimension_numbers=(((1,), (1,)), ((), ())),
        preferred_element_type=jnp.float32)


def _conv_stats_kernel(x_ref, w_ref, stats_ref, *, th):
    """Pass 1: per-image, per-channel sum / sum-of-squares of the conv output."""
    t = pl.program_id(1)
    acc = _conv_tile(x_ref, w_ref, t, th)                 # (Cout, th*W) f32

    @pl.when(t == 0)
    def _init():
        stats_ref[...] = jnp.zeros_like(stats_ref)

    stats_ref[0, :, 0:1] += jnp.sum(acc, axis=1, keepdims=True)
    stats_ref[0, :, 1:2] += jnp.sum(acc * acc, axis=1, keepdims=True)


def _conv_norm_relu_kernel(x_ref, w_ref, scale_ref, shift_ref, o_ref, *, th):
    """Pass 2: conv tile + pre-folded BN scale/shift (one FMA) + ReLU, lane-dense store."""
    t = pl.program_id(1)
    acc = _conv_tile(x_ref, w_ref, t, th)                 # (Cout, th*W) f32
    y = jnp.maximum(acc * scale_ref[...] + shift_ref[...], 0.0)
    o_ref[0, :, :] = y.astype(o_ref.dtype)


def _pick_row_tile(h, w):
    """Largest small row-tile dividing H with a lane-dense (TH*W % 128 == 0) output."""
    for th in (8, 16, 32, 64):
        if h % th == 0 and (th * w) % 128 == 0:
            return th
    return h  # single tile; output block then equals the full array extent


@jax.jit
def conv_layer_forward(x_nchw, weight_oihw, bias, gamma, beta):
    """Fused Conv3x3(pad=1, stride=1) + BatchNorm2d(train) + ReLU. NCHW in/out."""
    del bias  # per-channel conv bias is exactly cancelled by train-mode BatchNorm.

    n, cin, h, w = x_nchw.shape
    cout = weight_oihw.shape[0]
    th = _pick_row_tile(h, w)
    num_t = h // th

    # Layout glue: NCHW -> NHWC, 1-px halo pad, bf16 MXU operands.
    # TODO(synk): for very large feature maps, tile the input over H with
    # halo-windowed manual DMA instead of keeping one padded image per batch
    # item resident, and fold the pad into the kernel to skip the jnp.pad pass.
    x_nhwc = jnp.transpose(x_nchw, (0, 2, 3, 1)).astype(jnp.bfloat16)
    xp = jnp.pad(x_nhwc, ((0, 0), (1, 1), (1, 1), (0, 0)))        # (N, H+2, W+2, Cin)
    # (Cout, Cin, 3, 3) -> (Cout, dy, dx, Cin) -> (Cout, 9*Cin) im2col weights.
    w2 = jnp.transpose(weight_oihw, (0, 2, 3, 1)).reshape(cout, 9 * cin)
    w2 = w2.astype(jnp.bfloat16)

    x_spec = pl.BlockSpec((1, h + 2, w + 2, cin), lambda i, j: (i, 0, 0, 0))
    w_spec = pl.BlockSpec((cout, 9 * cin), lambda i, j: (0, 0))

    # Pass 1: conv + per-channel sum/sumsq, accumulated across the H-tile axis.
    stats = pl.pallas_call(
        functools.partial(_conv_stats_kernel, th=th),
        out_shape=jax.ShapeDtypeStruct((n, cout, 2), jnp.float32),
        grid=(n, num_t),
        in_specs=[x_spec, w_spec],
        out_specs=pl.BlockSpec((1, cout, 2), lambda i, j: (i, 0, 0)),
        compiler_params=pltpu.CompilerParams(
            dimension_semantics=("parallel", "arbitrary"),
            vmem_limit_bytes=32 * 1024 * 1024),
    )(xp, w2)

    # Fold BN (batch stats, biased variance, eps=1e-5) + gamma/beta into a
    # per-channel scale & shift so the kernel epilogue is a single FMA + max.
    inv_cnt = 1.0 / float(n * h * w)
    mean = jnp.sum(stats[:, :, 0], axis=0) * inv_cnt              # (Cout,)
    var = jnp.sum(stats[:, :, 1], axis=0) * inv_cnt - mean * mean
    inv_std = jax.lax.rsqrt(var + BN_EPS)
    scale = (gamma * inv_std).astype(jnp.float32).reshape(cout, 1)
    shift = (beta - mean * gamma * inv_std).astype(jnp.float32).reshape(cout, 1)

    # Pass 2: recompute conv tile (cheap; avoids an HBM round-trip of the f32
    # intermediate) + scale/shift + ReLU, stored as lane-dense (Cout, TH*W).
    out_flat = pl.pallas_call(
        functools.partial(_conv_norm_relu_kernel, th=th),
        out_shape=jax.ShapeDtypeStruct((n, cout, h * w), x_nchw.dtype),
        grid=(n, num_t),
        in_specs=[x_spec, w_spec,
                  pl.BlockSpec((cout, 1), lambda i, j: (0, 0)),
                  pl.BlockSpec((cout, 1), lambda i, j: (0, 0))],
        out_specs=pl.BlockSpec((1, cout, th * w), lambda i, j: (i, 0, j)),
        compiler_params=pltpu.CompilerParams(
            dimension_semantics=("parallel", "parallel"),
            vmem_limit_bytes=32 * 1024 * 1024),
    )(xp, w2, scale, shift)

    # (N, Cout, H*W) -> (N, Cout, H, W): pure metadata reshape, already NCHW.
    return out_flat.reshape(n, cout, h, w)


def _reference_forward(x, w, b, gamma, beta):
    # Pure-JAX (f32) reference matching the PyTorch module's forward math.
    y = jax.lax.conv_general_dilated(
        x, w, window_strides=(1, 1), padding=((1, 1), (1, 1)),
        dimension_numbers=("NCHW", "OIHW", "NCHW"))
    y = y + b.reshape(1, -1, 1, 1)
    mean = jnp.mean(y, axis=(0, 2, 3), keepdims=True)
    var = jnp.mean((y - mean) ** 2, axis=(0, 2, 3), keepdims=True)
    y = (y - mean) / jnp.sqrt(var + BN_EPS)
    y = y * gamma.reshape(1, -1, 1, 1) + beta.reshape(1, -1, 1, 1)
    return jnp.maximum(y, 0.0)


if __name__ == "__main__":
    key = jax.random.PRNGKey(0)
    k_x, k_w, k_b, k_g, k_bt = jax.random.split(key, 5)

    N, Cin, Cout, H, W = 2, 4, 8, 16, 16

    x = jax.random.normal(k_x, (N, Cin, H, W), dtype=jnp.float32)
    fan_in = Cin * 3 * 3
    weight = jax.random.normal(k_w, (Cout, Cin, 3, 3), dtype=jnp.float32) / np.sqrt(fan_in)
    bias = 0.1 * jax.random.normal(k_b, (Cout,), dtype=jnp.float32)
    gamma = 1.0 + 0.1 * jax.random.normal(k_g, (Cout,), dtype=jnp.float32)
    beta = 0.1 * jax.random.normal(k_bt, (Cout,), dtype=jnp.float32)

    out = conv_layer_forward(x, weight, bias, gamma, beta)
    out = jax.block_until_ready(out)

    ref = _reference_forward(x, weight, bias, gamma, beta)
    assert out.shape == (N, Cout, H, W)
    max_err = float(np.max(np.abs(np.asarray(out) - np.asarray(ref))))
    # bf16 MXU operands with f32 accumulation -> small, bounded mismatch vs f32 ref.
    assert np.allclose(np.asarray(out), np.asarray(ref), atol=2e-2, rtol=2e-2), max_err

    print("KERNEL_OK")
</pallas_src>

<mosaic_0001>
module attributes {stable_mosaic.version = 11 : i64} {
  func.func @_conv_stats_kernel(%arg0: i32, %arg1: i32, %arg2: memref<1x18x18x4xbf16, #tpu.memory_space<vmem>>, %arg3: memref<8x36xbf16, #tpu.memory_space<vmem>>, %arg4: memref<1x8x2xf32, #tpu.memory_space<vmem>>) attributes {dimension_semantics = [#tpu.dimension_semantics<parallel>, #tpu.dimension_semantics<arbitrary>], iteration_bounds = array<i64: 2, 2>, scalar_prefetch = 0 : i64, scratch_operands = 0 : i64, tpu.core_type = #tpu.core_type<tc>, window_params = [{transform_indices = @transform_0, window_bounds = array<i64: 1, 18, 18, 4>}, {pipeline_mode = #tpu.pipeline_mode<synchronous>, transform_indices = @transform_1, window_bounds = array<i64: 8, 36>}, {transform_indices = @transform_2, window_bounds = array<i64: 1, 8, 2>}]} {
    %c8_i32 = arith.constant 8 : i32
    %0 = arith.muli %arg1, %c8_i32 : i32
    %1 = tpu.assume_multiple %0, 8 : i32
    %c0 = arith.constant 0 : index
    %2 = arith.index_cast %1 : i32 to index
    %c0_0 = arith.constant 0 : index
    %c0_1 = arith.constant 0 : index
    %3 = vector.load %arg2[%c0, %2, %c0_0, %c0_1] : memref<1x18x18x4xbf16, #tpu.memory_space<vmem>>, vector<1x10x18x4xbf16>
    %4 = vector.shape_cast %3 : vector<1x10x18x4xbf16> to vector<10x18x4xbf16>
    %5 = vector.extract_strided_slice %4 {offsets = [0, 0, 0], sizes = [8, 16, 4], strides = [1, 1, 1]} : vector<10x18x4xbf16> to vector<8x16x4xbf16>
    %6 = vector.extract_strided_slice %4 {offsets = [0, 1, 0], sizes = [8, 16, 4], strides = [1, 1, 1]} : vector<10x18x4xbf16> to vector<8x16x4xbf16>
    %7 = vector.extract_strided_slice %4 {offsets = [0, 2, 0], sizes = [8, 16, 4], strides = [1, 1, 1]} : vector<10x18x4xbf16> to vector<8x16x4xbf16>
    %8 = vector.extract_strided_slice %4 {offsets = [1, 0, 0], sizes = [8, 16, 4], strides = [1, 1, 1]} : vector<10x18x4xbf16> to vector<8x16x4xbf16>
    %9 = vector.extract_strided_slice %4 {offsets = [1, 1, 0], sizes = [8, 16, 4], strides = [1, 1, 1]} : vector<10x18x4xbf16> to vector<8x16x4xbf16>
    %10 = vector.extract_strided_slice %4 {offsets = [1, 2, 0], sizes = [8, 16, 4], strides = [1, 1, 1]} : vector<10x18x4xbf16> to vector<8x16x4xbf16>
    %11 = vector.extract_strided_slice %4 {offsets = [2, 0, 0], sizes = [8, 16, 4], strides = [1, 1, 1]} : vector<10x18x4xbf16> to vector<8x16x4xbf16>
    %12 = vector.extract_strided_slice %4 {offsets = [2, 1, 0], sizes = [8, 16, 4], strides = [1, 1, 1]} : vector<10x18x4xbf16> to vector<8x16x4xbf16>
    %13 = vector.extract_strided_slice %4 {offsets = [2, 2, 0], sizes = [8, 16, 4], strides = [1, 1, 1]} : vector<10x18x4xbf16> to vector<8x16x4xbf16>
    %14 = tpu.concatenate %5, %6, %7, %8, %9, %10, %11, %12, %13 in 2 : vector<8x16x4xbf16>, vector<8x16x4xbf16>, vector<8x16x4xbf16>, vector<8x16x4xbf16>, vector<8x16x4xbf16>, vector<8x16x4xbf16>, vector<8x16x4xbf16>, vector<8x16x4xbf16>, vector<8x16x4xbf16> -> vector<8x16x36xbf16>
    %15 = vector.shape_cast %14 : vector<8x16x36xbf16> to vector<128x36xbf16>
    %c0_2 = arith.constant 0 : index
    %c0_3 = arith.constant 0 : index
    %16 = vector.load %arg3[%c0_2, %c0_3] : memref<8x36xbf16, #tpu.memory_space<vmem>>, vector<8x36xbf16>
    %cst = arith.constant dense<0.000000e+00> : vector<8x128xf32>
    %17 = tpu.matmul %16, %15, %cst {dimension_numbers = #tpu.dot_dimension_numbers<[1], [1], [0], [0], [0, 0, 1, 0], [], []>} : vector<8x36xbf16>, vector<128x36xbf16>, vector<8x128xf32> -> vector<8x128xf32>
    %c0_i32 = arith.constant 0 : i32
    %18 = arith.cmpi eq, %arg1, %c0_i32 : i32
    %19 = arith.extui %18 : i1 to i32
    %c0_i32_4 = arith.constant 0 : i32
    %20 = arith.cmpi ne, %19, %c0_i32_4 : i32
    scf.if %20 {
      %cst_18 = arith.constant 0.000000e+00 : f32
      %38 = vector.broadcast %cst_18 : f32 to vector<1x8x2xf32>
      %c0_19 = arith.constant 0 : index
      %c0_20 = arith.constant 0 : index
      %c0_21 = arith.constant 0 : index
      %39 = vector.load %arg4[%c0_19, %c0_20, %c0_21] : memref<1x8x2xf32, #tpu.memory_space<vmem>>, vector<1x8x2xf32>
      tpu.vector_store %arg4[%c0_19, %c0_20, %c0_21], %38 {strides = array<i32>} : memref<1x8x2xf32, #tpu.memory_space<vmem>>, vector<1x8x2xf32>,
    } else {
    }
    %c0_5 = arith.constant 0 : index
    %c0_6 = arith.constant 0 : index
    %c0_7 = arith.constant 0 : index
    %21 = vector.load %arg4[%c0_5, %c0_6, %c0_7] : memref<1x8x2xf32, #tpu.memory_space<vmem>>, vector<1x8x1xf32>
    %22 = vector.shape_cast %21 : vector<1x8x1xf32> to vector<8x1xf32>
    %cst_8 = arith.constant dense<0.000000e+00> : vector<8xf32>
    %23 = vector.multi_reduction <add>, %17, %cst_8 [1] : vector<8x128xf32> to vector<8xf32>
    %24 = vector.shape_cast %23 : vector<8xf32> to vector<8x1xf32>
    %25 = arith.addf %22, %24 : vector<8x1xf32>
    %c0_9 = arith.constant 0 : index
    %c0_10 = arith.constant 0 : index
    %c0_11 = arith.constant 0 : index
    %26 = vector.load %arg4[%c0_9, %c0_10, %c0_11] : memref<1x8x2xf32, #tpu.memory_space<vmem>>, vector<1x8x1xf32>
    %27 = vector.shape_cast %26 : vector<1x8x1xf32> to vector<8x1xf32>
    %28 = vector.shape_cast %25 : vector<8x1xf32> to vector<1x8x1xf32>
    tpu.vector_store %arg4[%c0_9, %c0_10, %c0_11], %28 {strides = array<i32>} : memref<1x8x2xf32, #tpu.memory_space<vmem>>, vector<1x8x1xf32>,
    %c0_12 = arith.constant 0 : index
    %c0_13 = arith.constant 0 : index
    %c1 = arith.constant 1 : index
    %29 = vector.load %arg4[%c0_12, %c0_13, %c1] : memref<1x8x2xf32, #tpu.memory_space<vmem>>, vector<1x8x1xf32>
    %30 = vector.shape_cast %29 : vector<1x8x1xf32> to vector<8x1xf32>
    %31 = arith.mulf %17, %17 : vector<8x128xf32>
    %cst_14 = arith.constant dense<0.000000e+00> : vector<8xf32>
    %32 = vector.multi_reduction <add>, %31, %cst_14 [1] : vector<8x128xf32> to vector<8xf32>
    %33 = vector.shape_cast %32 : vector<8xf32> to vector<8x1xf32>
    %34 = arith.addf %30, %33 : vector<8x1xf32>
    %c0_15 = arith.constant 0 : index
    %c0_16 = arith.constant 0 : index
    %c1_17 = arith.constant 1 : index
    %35 = vector.load %arg4[%c0_15, %c0_16, %c1_17] : memref<1x8x2xf32, #tpu.memory_space<vmem>>, vector<1x8x1xf32>
    %36 = vector.shape_cast %35 : vector<1x8x1xf32> to vector<8x1xf32>
    %37 = vector.shape_cast %34 : vector<8x1xf32> to vector<1x8x1xf32>
    tpu.vector_store %arg4[%c0_15, %c0_16, %c1_17], %37 {strides = array<i32>} : memref<1x8x2xf32, #tpu.memory_space<vmem>>, vector<1x8x1xf32>,
    return
  }
  func.func @transform_0(%arg0: i32, %arg1: i32) -> (i32, i32, i32, i32) {
    %c0_i32 = arith.constant 0 : i32
    %c0_i32_0 = arith.constant 0 : i32
    %c0_i32_1 = arith.constant 0 : i32
    %c0_i32_2 = arith.constant 0 : i32
    return %arg0, %c0_i32, %c0_i32_0, %c0_i32_1 : i32, i32, i32, i32
  }
  func.func @transform_1(%arg0: i32, %arg1: i32) -> (i32, i32) {
    %c0_i32 = arith.constant 0 : i32
    %c0_i32_0 = arith.constant 0 : i32
    %c0_i32_1 = arith.constant 0 : i32
    return %c0_i32, %c0_i32_0 : i32, i32
  }
  func.func @transform_2(%arg0: i32, %arg1: i32) -> (i32, i32, i32) {
    %c0_i32 = arith.constant 0 : i32
    %c0_i32_0 = arith.constant 0 : i32
    %c0_i32_1 = arith.constant 0 : i32
    return %arg0, %c0_i32, %c0_i32_0 : i32, i32, i32
  }
}

module attributes {stable_mosaic.version = 11 : i64} {
  func.func @_conv_norm_relu_kernel(%arg0: i32, %arg1: i32, %arg2: memref<1x18x18x4xbf16, #tpu.memory_space<vmem>>, %arg3: memref<8x36xbf16, #tpu.memory_space<vmem>>, %arg4: memref<8x1xf32, #tpu.memory_space<vmem>>, %arg5: memref<8x1xf32, #tpu.memory_space<vmem>>, %arg6: memref<1x8x128xf32, #tpu.memory_space<vmem>>) attributes {dimension_semantics = [#tpu.dimension_semantics<parallel>, #tpu.dimension_semantics<parallel>], iteration_bounds = array<i64: 2, 2>, scalar_prefetch = 0 : i64, scratch_operands = 0 : i64, tpu.core_type = #tpu.core_type<tc>, window_params = [{transform_indices = @transform_0, window_bounds = array<i64: 1, 18, 18, 4>}, {pipeline_mode = #tpu.pipeline_mode<synchronous>, transform_indices = @transform_1, window_bounds = array<i64: 8, 36>}, {pipeline_mode = #tpu.pipeline_mode<synchronous>, transform_indices = @transform_2, window_bounds = array<i64: 8, 1>}, {pipeline_mode = #tpu.pipeline_mode<synchronous>, transform_indices = @transform_3, window_bounds = array<i64: 8, 1>}, {transform_indices = @transform_4, window_bounds = array<i64: 1, 8, 128>}]} {
    %c8_i32 = arith.constant 8 : i32
    %0 = arith.muli %arg1, %c8_i32 : i32
    %1 = tpu.assume_multiple %0, 8 : i32
    %c0 = arith.constant 0 : index
    %2 = arith.index_cast %1 : i32 to index
    %c0_0 = arith.constant 0 : index
    %c0_1 = arith.constant 0 : index
    %3 = vector.load %arg2[%c0, %2, %c0_0, %c0_1] : memref<1x18x18x4xbf16, #tpu.memory_space<vmem>>, vector<1x10x18x4xbf16>
    %4 = vector.shape_cast %3 : vector<1x10x18x4xbf16> to vector<10x18x4xbf16>
    %5 = vector.extract_strided_slice %4 {offsets = [0, 0, 0], sizes = [8, 16, 4], strides = [1, 1, 1]} : vector<10x18x4xbf16> to vector<8x16x4xbf16>
    %6 = vector.extract_strided_slice %4 {offsets = [0, 1, 0], sizes = [8, 16, 4], strides = [1, 1, 1]} : vector<10x18x4xbf16> to vector<8x16x4xbf16>
    %7 = vector.extract_strided_slice %4 {offsets = [0, 2, 0], sizes = [8, 16, 4], strides = [1, 1, 1]} : vector<10x18x4xbf16> to vector<8x16x4xbf16>
    %8 = vector.extract_strided_slice %4 {offsets = [1, 0, 0], sizes = [8, 16, 4], strides = [1, 1, 1]} : vector<10x18x4xbf16> to vector<8x16x4xbf16>
    %9 = vector.extract_strided_slice %4 {offsets = [1, 1, 0], sizes = [8, 16, 4], strides = [1, 1, 1]} : vector<10x18x4xbf16> to vector<8x16x4xbf16>
    %10 = vector.extract_strided_slice %4 {offsets = [1, 2, 0], sizes = [8, 16, 4], strides = [1, 1, 1]} : vector<10x18x4xbf16> to vector<8x16x4xbf16>
    %11 = vector.extract_strided_slice %4 {offsets = [2, 0, 0], sizes = [8, 16, 4], strides = [1, 1, 1]} : vector<10x18x4xbf16> to vector<8x16x4xbf16>
    %12 = vector.extract_strided_slice %4 {offsets = [2, 1, 0], sizes = [8, 16, 4], strides = [1, 1, 1]} : vector<10x18x4xbf16> to vector<8x16x4xbf16>
    %13 = vector.extract_strided_slice %4 {offsets = [2, 2, 0], sizes = [8, 16, 4], strides = [1, 1, 1]} : vector<10x18x4xbf16> to vector<8x16x4xbf16>
    %14 = tpu.concatenate %5, %6, %7, %8, %9, %10, %11, %12, %13 in 2 : vector<8x16x4xbf16>, vector<8x16x4xbf16>, vector<8x16x4xbf16>, vector<8x16x4xbf16>, vector<8x16x4xbf16>, vector<8x16x4xbf16>, vector<8x16x4xbf16>, vector<8x16x4xbf16>, vector<8x16x4xbf16> -> vector<8x16x36xbf16>
    %15 = vector.shape_cast %14 : vector<8x16x36xbf16> to vector<128x36xbf16>
    %c0_2 = arith.constant 0 : index
    %c0_3 = arith.constant 0 : index
    %16 = vector.load %arg3[%c0_2, %c0_3] : memref<8x36xbf16, #tpu.memory_space<vmem>>, vector<8x36xbf16>
    %cst = arith.constant dense<0.000000e+00> : vector<8x128xf32>
    %17 = tpu.matmul %16, %15, %cst {dimension_numbers = #tpu.dot_dimension_numbers<[1], [1], [0], [0], [0, 0, 1, 0], [], []>} : vector<8x36xbf16>, vector<128x36xbf16>, vector<8x128xf32> -> vector<8x128xf32>
    %c0_4 = arith.constant 0 : index
    %c0_5 = arith.constant 0 : index
    %18 = vector.load %arg4[%c0_4, %c0_5] : memref<8x1xf32, #tpu.memory_space<vmem>>, vector<8x1xf32>
    %19 = vector.broadcast %18 : vector<8x1xf32> to vector<8x128xf32>
    %20 = arith.mulf %17, %19 : vector<8x128xf32>
    %c0_6 = arith.constant 0 : index
    %c0_7 = arith.constant 0 : index
    %21 = vector.load %arg5[%c0_6, %c0_7] : memref<8x1xf32, #tpu.memory_space<vmem>>, vector<8x1xf32>
    %22 = vector.broadcast %21 : vector<8x1xf32> to vector<8x128xf32>
    %23 = arith.addf %20, %22 : vector<8x128xf32>
    %cst_8 = arith.constant 0.000000e+00 : f32
    %24 = vector.broadcast %cst_8 : f32 to vector<8x128xf32>
    %25 = arith.maximumf %23, %24 : vector<8x128xf32>
    %c0_9 = arith.constant 0 : index
    %c0_10 = arith.constant 0 : index
    %c0_11 = arith.constant 0 : index
    %26 = vector.load %arg6[%c0_9, %c0_10, %c0_11] : memref<1x8x128xf32, #tpu.memory_space<vmem>>, vector<1x8x128xf32>
    %27 = vector.shape_cast %26 : vector<1x8x128xf32> to vector<8x128xf32>
    %28 = vector.shape_cast %25 : vector<8x128xf32> to vector<1x8x128xf32>
    tpu.vector_store %arg6[%c0_9, %c0_10, %c0_11], %28 {strides = array<i32>} : memref<1x8x128xf32, #tpu.memory_space<vmem>>, vector<1x8x128xf32>,
    return
  }
  func.func @transform_0(%arg0: i32, %arg1: i32) -> (i32, i32, i32, i32) {
    %c0_i32 = arith.constant 0 : i32
    %c0_i32_0 = arith.constant 0 : i32
    %c0_i32_1 = arith.constant 0 : i32
    %c0_i32_2 = arith.constant 0 : i32
    return %arg0, %c0_i32, %c0_i32_0, %c0_i32_1 : i32, i32, i32, i32
  }
  func.func @transform_1(%arg0: i32, %arg1: i32) -> (i32, i32) {
    %c0_i32 = arith.constant 0 : i32
    %c0_i32_0 = arith.constant 0 : i32
    %c0_i32_1 = arith.constant 0 : i32
    return %c0_i32, %c0_i32_0 : i32, i32
  }
  func.func @transform_2(%arg0: i32, %arg1: i32) -> (i32, i32) {
    %c0_i32 = arith.constant 0 : i32
    %c0_i32_0 = arith.constant 0 : i32
    %c0_i32_1 = arith.constant 0 : i32
    return %c0_i32, %c0_i32_0 : i32, i32
  }
  func.func @transform_3(%arg0: i32, %arg1: i32) -> (i32, i32) {
    %c0_i32 = arith.constant 0 : i32
    %c0_i32_0 = arith.constant 0 : i32
    %c0_i32_1 = arith.constant 0 : i32
    return %c0_i32, %c0_i32_0 : i32, i32
  }
  func.func @transform_4(%arg0: i32, %arg1: i32) -> (i32, i32, i32) {
    %c0_i32 = arith.constant 0 : i32
    %c0_i32_0 = arith.constant 0 : i32
    return %arg0, %c0_i32, %arg1 : i32, i32, i32
  }
}

</mosaic_0001>

<llo_original>
// kernel: conv_layer_forward.3
$region0: #{conv_layer_forward.3}
  #allocation0 [shape = 'u32[]', space=smem, size = 0x4, offset = 0x4, fixed_abs, tag = 'smem constant byte address 0x4 - core index']
  #allocation1 [shape = 'u32[144,128]{1,0:T(1,128)}', space=vmem, size = 0x12000, scoped, tag = 'internal scratch']
  %s0 = inlined_call_operand.vmem [shape: bf16[2,18,18,4], index: 0, kind: input, shape index: {}]
  %s1 = inlined_call_operand.vmem [shape: bf16[8,36], index: 1, kind: input, shape index: {}]
  %s2 = inlined_call_operand.vmem [shape: f32[8,1], index: 2, kind: input, shape index: {}]
  %s3 = inlined_call_operand.vmem [shape: f32[8,1], index: 3, kind: input, shape index: {}]
  %s4 = inlined_call_operand.vmem [shape: f32[2,8,256], index: 4, kind: output, shape index: {}]
  %s5 = sld [smem:[#allocation0]]
  $region49: #{conv_layer_forward.3} parent=0
    _
  %s7 = ssub.s32 1, %s5
  %s8 = scalar_select 0, %s7, %s5
  loop: start=0, step=1, limit=6
  $region2: #{conv_layer_forward.3} parent=0 // loop_pre_header
    _
  $region3: #{conv_layer_forward.3} parent=0 // loop_header
    %s10 = sphi 0, %s14
    %p11 = scmp.ge.s32.totalorder %s10, 6
    %s17 = sphi 0, %s29
    %s18 = sphi 0, %s25
    %s19 = sphi 0, %s17
    %s20 = sphi 0, %s18
    %s21 = sphi 0, %s19
    %s22 = sphi 0, %s20
    %s32 = sphi 0, %s34
    %s35 = sphi 0, %s32
    %s36 = sphi 0, %s35
    %s52 = sphi 0, %s36
    %s56 = sphi 0, %s56
    %s58 = sphi 0, %s56
    %s59 = sphi 0, %s58
    %s73 = sphi 0, %s59
    %s77 = sphi 0, %s77
    %s79 = sphi 0, %s77
    %s80 = sphi 0, %s79
    %s94 = sphi 0, %s80
    %s98 = sphi 0, %s98
    %s100 = sphi 0, %s98
    %s101 = sphi 0, %s100
    %s115 = sphi 0, %s101
    %s123 = sphi 0, %s125
    %s126 = sphi 0, %s123
    %s127 = sphi 0, %s126
    %s143 = sphi 0, %s127
  $region4: #{conv_layer_forward.3} parent=0 // loop_header_branch
    %13 = sbr.rel (%p11) target = $region8
  $region5: #{conv_layer_forward.3} parent=0 // loop_body
    %s15 = ssub.s32 %s10, 1
    %s16 = ssub.s32 %s10, 2
    %s23 = sadd.s32 1, %s18
    %p24 = scmp.ge.s32.totalorder %s23, 2
    %s25 = scalar_select %p24, 0, %s23
    %s26 = sadd.s32 1, %s17
    %s27 = scalar_select %p24, %s26, %s17
    %p28 = scmp.ge.s32.totalorder %s27, 2
    %s29 = scalar_select %p28, 0, %s27
    %s30 = ssub.s32 %s17, %s29
    %p31 = scmp.eq.s32.totalorder %s30, 0
    %s33 = sadd.s32 %s32, 1
    %s34 = scalar_select %p31, %s32, %s33
    %p37 = pneg %p31
    %p38 = scmp.eq.s32.totalorder %s10, 3
    %p39 = por %p37, %p38
    %p40 = scmp.ne.s32.totalorder %s32, %s35
    %p41 = scmp.eq.s32.totalorder %s10, 0
    %p42 = por %p40, %p41
    %p43 = scmp.ne.s32.totalorder %s32, %s35
    %p44 = scmp.eq.s32.totalorder %s15, 3
    %p45 = por %p43, %p44
    %p46 = scmp.ne.s32.totalorder %s35, %s36
    %p47 = scmp.eq.s32.totalorder %s15, 0
    %p48 = por %p46, %p47
    %p49 = scmp.ne.s32.totalorder %s35, %s36
    %p50 = scmp.eq.s32.totalorder %s16, 3
    %p51 = por %p49, %p50
    %p53 = scmp.ne.s32.totalorder %s36, %s52
    %p54 = scmp.eq.s32.totalorder %s16, 0
    %p55 = por %p53, %p54
    %s57 = sadd.s32 %s56, 1
    %p60 = scmp.eq.s32.totalorder %s10, 3
    %p61 = scmp.ne.s32.totalorder %s56, %s58
    %p62 = scmp.eq.s32.totalorder %s10, 0
    %p63 = por %p61, %p62
    %p64 = scmp.ne.s32.totalorder %s56, %s58
    %p65 = scmp.eq.s32.totalorder %s15, 3
    %p66 = por %p64, %p65
    %p67 = scmp.ne.s32.totalorder %s58, %s59
    %p68 = scmp.eq.s32.totalorder %s15, 0
    %p69 = por %p67, %p68
    %p70 = scmp.ne.s32.totalorder %s58, %s59
    %p71 = scmp.eq.s32.totalorder %s16, 3
    %p72 = por %p70, %p71
    %p74 = scmp.ne.s32.totalorder %s59, %s73
    %p75 = scmp.eq.s32.totalorder %s16, 0
    %p76 = por %p74, %p75
    %s78 = sadd.s32 %s77, 1
    %p81 = scmp.eq.s32.totalorder %s10, 3
    %p82 = scmp.ne.s32.totalorder %s77, %s79
    %p83 = scmp.eq.s32.totalorder %s10, 0
    %p84 = por %p82, %p83
    %p85 = scmp.ne.s32.totalorder %s77, %s79
    %p86 = scmp.eq.s32.totalorder %s15, 3
    %p87 = por %p85, %p86
    %p88 = scmp.ne.s32.totalorder %s79, %s80
    %p89 = scmp.eq.s32.totalorder %s15, 0
    %p90 = por %p88, %p89
    %p91 = scmp.ne.s32.totalorder %s79, %s80
    %p92 = scmp.eq.s32.totalorder %s16, 3
    %p93 = por %p91, %p92
    %p95 = scmp.ne.s32.totalorder %s80, %s94
    %p96 = scmp.eq.s32.totalorder %s16, 0
    %p97 = por %p95, %p96
    %s99 = sadd.s32 %s98, 1
    %p102 = scmp.eq.s32.totalorder %s10, 3
    %p103 = scmp.ne.s32.totalorder %s98, %s100
    %p104 = scmp.eq.s32.totalorder %s10, 0
    %p105 = por %p103, %p104
    %p106 = scmp.ne.s32.totalorder %s98, %s100
    %p107 = scmp.eq.s32.totalorder %s15, 3
    %p108 = por %p106, %p107
    %p109 = scmp.ne.s32.totalorder %s100, %s101
    %p110 = scmp.eq.s32.totalorder %s15, 0
    %p111 = por %p109, %p110
    %p112 = scmp.ne.s32.totalorder %s100, %s101
    %p113 = scmp.eq.s32.totalorder %s16, 3
    %p114 = por %p112, %p113
    %p116 = scmp.ne.s32.totalorder %s101, %s115
    %p117 = scmp.eq.s32.totalorder %s16, 0
    %p118 = por %p116, %p117
    %s119 = ssub.s32 %s17, %s29
    %s120 = ssub.s32 %s18, %s25
    %s121 = sor.u32 %s119, %s120
    %p122 = scmp.eq.s32.totalorder %s121, 0
    %s124 = sadd.s32 %s123, 1
    %s125 = scalar_select %p122, %s123, %s124
    %p128 = pneg %p122
    %p129 = scmp.eq.s32.totalorder %s10, 3
    %p130 = por %p128, %p129
    %p131 = scmp.ne.s32.totalorder %s123, %s126
    %p132 = scmp.eq.s32.totalorder %s10, 0
    %p133 = por %p131, %p132
    %p134 = scmp.ne.s32.totalorder %s123, %s126
    %p135 = scmp.eq.s32.totalorder %s15, 3
    %p136 = por %p134, %p135
    %p137 = scmp.ne.s32.totalorder %s126, %s127
    %p138 = scmp.eq.s32.totalorder %s15, 0
    %p139 = por %p137, %p138
    %p140 = scmp.ne.s32.totalorder %s126, %s127
    %p141 = scmp.eq.s32.totalorder %s16, 3
    %p142 = por %p140, %p141
    %p144 = scmp.ne.s32.totalorder %s127, %s143
    %p145 = scmp.eq.s32.totalorder %s16, 0
    %p146 = por %p144, %p145
    %p147 = scmp.le.s32.totalorder 1, %s10
    %p148 = scmp.lt.s32.totalorder %s10, 5
    %p149 = pnand %p147, %p148
    %p150 = pneg %p149
    // Predicated region
    $region9: #{conv_layer_forward.3} parent=5 // pred_check
      _
    $region10: #{conv_layer_forward.3} parent=5 // pred_check_branch
      %152 = sbr.rel (%p149) target = $region12
    $region11: #{conv_layer_forward.3} parent=5 // pred_region
      %s153 = ssub.s32 %s10, 1
      // Predicated region
      $region13: #{conv_layer_forward.3} parent=11 // pred_check
        %p154 = pneg %p69
      $region14: #{conv_layer_forward.3} parent=11 // pred_check_branch
        %156 = sbr.rel (%p154) target = $region16
      $region15: #{conv_layer_forward.3} parent=11 // pred_region
        _
      $region16: #{conv_layer_forward.3} parent=11 // pred_fallthru
        _
      // Predicated region
      $region17: #{conv_layer_forward.3} parent=11 // pred_check
        %p157 = pneg %p90
      $region18: #{conv_layer_forward.3} parent=11 // pred_check_branch
        %159 = sbr.rel (%p157) target = $region20
      $region19: #{conv_layer_forward.3} parent=11 // pred_region
        _
      $region20: #{conv_layer_forward.3} parent=11 // pred_fallthru
        _
      // Predicated region
      $region21: #{conv_layer_forward.3} parent=11 // pred_check
        %p160 = pneg %p111
      $region22: #{conv_layer_forward.3} parent=11 // pred_check_branch
        %162 = sbr.rel (%p160) target = $region24
      $region23: #{conv_layer_forward.3} parent=11 // pred_region
        _
      $region24: #{conv_layer_forward.3} parent=11 // pred_fallthru
        _
    $region12: #{conv_layer_forward.3} parent=5 // pred_fallthru
      _
    %p163 = scmp.lt.s32.totalorder %s10, 4
    // Predicated region
    $region25: #{conv_layer_forward.3} parent=5 // pred_check
      %p164 = pneg %p163
    $region26: #{conv_layer_forward.3} parent=5 // pred_check_branch
      %166 = sbr.rel (%p164) target = $region28
    $region27: #{conv_layer_forward.3} parent=5 // pred_region
      // Predicated region
      $region29: #{conv_layer_forward.3} parent=27 // pred_check
        %p167 = pneg %p42
      $region30: #{conv_layer_forward.3} parent=27 // pred_check_branch
        %169 = sbr.rel (%p167) target = $region32
      $region31: #{conv_layer_forward.3} parent=27 // pred_region
        %p170 = scmp.lt.s32.totalorder %s17, 1
        %s171 = scalar_select %p170, %s17, 1
        %s172 = smul.addr %s171, 54
        %s173 = smul.addr %s172, 4
        %s174 = scalar_lea.vmem %s0, %s173
      $region32: #{conv_layer_forward.3} parent=27 // pred_fallthru
        _
    $region28: #{conv_layer_forward.3} parent=5 // pred_fallthru
      _
    %p175 = scmp.le.s32.totalorder 1, %s10
    %p176 = scmp.lt.s32.totalorder %s10, 5
    %p177 = pnand %p175, %p176
    %p178 = pneg %p177
    // Predicated region
    $region33: #{conv_layer_forward.3} parent=5 // pred_check
      _
    $region34: #{conv_layer_forward.3} parent=5 // pred_check_branch
      %180 = sbr.rel (%p177) target = $region36
    $region35: #{conv_layer_forward.3} parent=5 // pred_region
      %s181 = ssub.s32 %s10, 1
      %p182 = scmp.lt.s32.totalorder %s19, 1
      %s183 = scalar_select %p182, %s19, 1
      %s184 = smul.addr %s183, 54
      %s185 = smul.addr %s184, 4
      %s186 = scalar_lea.vmem %s0, %s185
      %p187 = pneg %p48
      %p188 = pneg %p45
      %p189 = pneg %p69
      %p190 = pneg %p66
      %p191 = pneg %p90
      %p192 = pneg %p87
      %p193 = pneg %p111
      %p194 = pneg %p108
      %p195 = pneg %p139
      %p196 = pneg %p136
      %p197 = scmp.lt.s32.totalorder %s19, 1
      %s198 = scalar_select %p197, %s19, 1
      %p199 = scmp.lt.s32.totalorder %s20, 1
      %s200 = scalar_select %p199, %s20, 1
      %s201 = smul.addr %s198, 2
      %s202 = sadd.s32 %s200, %s201
      %s203 = smul.addr %s202, 8
      %s204 = scalar_lea.vmem %s4, %s203
      %p205 = scmp.lt.s32.totalorder %s19, 1
      %s206 = scalar_select %p205, %s19, 1
      %s207 = smul.addr %s206, 54
      %s208 = smul.addr %s207, 4
      %s209 = scalar_lea.vmem %s0, %s208
      %p210 = scmp.lt.s32.totalorder %s19, 1
      %s211 = scalar_select %p210, %s19, 1
      %p212 = scmp.lt.s32.totalorder %s20, 1
      %s213 = scalar_select %p212, %s20, 1
      %s214 = smul.addr %s211, 2
      %s215 = sadd.s32 %s213, %s214
      %s216 = smul.addr %s215, 8
      %s217 = scalar_lea.vmem %s4, %s216
      %s219 = smul.u32 %s20, 8
      %s220 = smul.u32 %s219, 3
      %s221 = smul.addr %s220, 4
      %s222 = scalar_lea.vmem %s209, %s221
      %v223 = vld [vmem:[%s222] sm:$0xf]
      %v224 = vld [vmem:[%s222 + $0x4] sm:$0xf]
      %v225 = vld [vmem:[%s222 + $0x8] sm:$0x1]
      %v226 = vld [vmem:[%s222 + $0xc] sm:$0xf]
      %v227 = vld [vmem:[%s222 + $0x10] sm:$0xf]
      %v228 = vld [vmem:[%s222 + $0x14] sm:$0x1]
      %v229 = vld [vmem:[%s222 + $0x18] sm:$0xf]
      %v230 = vld [vmem:[%s222 + $0x1c] sm:$0xf]
      %v231 = vld [vmem:[%s222 + $0x20] sm:$0x1]
      %v232 = vld [vmem:[%s222 + $0x24] sm:$0xf]
      %v233 = vld [vmem:[%s222 + $0x28] sm:$0xf]
      %v234 = vld [vmem:[%s222 + $0x2c] sm:$0x1]
      %v235 = vld [vmem:[%s222 + $0x30] sm:$0xf]
      %v236 = vld [vmem:[%s222 + $0x34] sm:$0xf]
      %v237 = vld [vmem:[%s222 + $0x38] sm:$0x1]
      %v238 = vld [vmem:[%s222 + $0x3c] sm:$0xf]
      %v239 = vld [vmem:[%s222 + $0x40] sm:$0xf]
      %v240 = vld [vmem:[%s222 + $0x44] sm:$0x1]
      %v241 = vld [vmem:[%s222 + $0x48] sm:$0xf]
      %v242 = vld [vmem:[%s222 + $0x4c] sm:$0xf]
      %v243 = vld [vmem:[%s222 + $0x50] sm:$0x1]
      %v244 = vld [vmem:[%s222 + $0x54] sm:$0xf]
      %v245 = vld [vmem:[%s222 + $0x58] sm:$0xf]
      %v246 = vld [vmem:[%s222 + $0x5c] sm:$0x1]
      %v247 = vld [vmem:[%s222 + $0x60] sm:$0xf]
      %v248 = vld [vmem:[%s222 + $0x64] sm:$0xf]
      %v249 = vld [vmem:[%s222 + $0x68] sm:$0x1]
      %v250 = vld [vmem:[%s222 + $0x6c] sm:$0xf]
      %v251 = vld [vmem:[%s222 + $0x70] sm:$0xf]
      %v252 = vld [vmem:[%s222 + $0x74] sm:$0x1]
      %v269 = vunpack.c.l.b16 %v223
      %v270 = vunpack.c.l.b16 %v224
      %v271 = vunpack.c.l.b16 %v226
      %v272 = vunpack.c.l.b16 %v227
      %v273 = vunpack.c.l.b16 %v229
      %v274 = vunpack.c.l.b16 %v230
      %v275 = vunpack.c.l.b16 %v232
      %v276 = vunpack.c.l.b16 %v233
      %v277 = vunpack.c.l.b16 %v235
      %v278 = vunpack.c.l.b16 %v236
      %v279 = vunpack.c.l.b16 %v238
      %v280 = vunpack.c.l.b16 %v239
      %v281 = vunpack.c.l.b16 %v241
      %v282 = vunpack.c.l.b16 %v242
      %v283 = vunpack.c.l.b16 %v244
      %v284 = vunpack.c.l.b16 %v245
      %v285 = vpack.c.b16 %v270, %v269
      %v286 = vpack.c.b16 %v272, %v271
      %v287 = vpack.c.b16 %v274, %v273
      %v288 = vpack.c.b16 %v276, %v275
      %v289 = vpack.c.b16 %v278, %v277
      %v290 = vpack.c.b16 %v280, %v279
      %v291 = vpack.c.b16 %v282, %v281
      %v292 = vpack.c.b16 %v284, %v283
      %v301 = vunpack.c.l.b16 %v225
      %v302 = vunpack.c.l.b16 %v228
      %v303 = vunpack.c.l.b16 %v231
      %v304 = vunpack.c.l.b16 %v234
      %v305 = vunpack.c.l.b16 %v237
      %v306 = vunpack.c.l.b16 %v240
      %v307 = vunpack.c.l.b16 %v243
      %v308 = vunpack.c.l.b16 %v246
      %v309 = vpack.c.b16 %v301, %v301
      %v310 = vpack.c.b16 %v302, %v302
      %v311 = vpack.c.b16 %v303, %v303
      %v312 = vpack.c.b16 %v304, %v304
      %v313 = vpack.c.b16 %v305, %v305
      %v314 = vpack.c.b16 %v306, %v306
      %v315 = vpack.c.b16 %v307, %v307
      %v316 = vpack.c.b16 %v308, %v308
      %vm317 = vsmask.f32 7424
      %v319 = vshrl.u32 %v285, 16
      %v321 = vshll.u32 %v285, 16
      %v323 = vrot.slane %v321, 1
      %v324 = vor.u32 %v319, %v323
      %v326 = vshll.u32 %v309, 16
      %v328 = vrot.slane %v326, 1
      %v329 = vsel %vm317, %v324, %v328
      %v331 = vshrl.u32 %v286, 16
      %v333 = vshll.u32 %v286, 16
      %v335 = vrot.slane %v333, 1
      %v336 = vor.u32 %v331, %v335
      %v338 = vshll.u32 %v310, 16
      %v340 = vrot.slane %v338, 1
      %v341 = vsel %vm317, %v336, %v340
      %v343 = vshrl.u32 %v287, 16
      %v345 = vshll.u32 %v287, 16
      %v347 = vrot.slane %v345, 1
      %v348 = vor.u32 %v343, %v347
      %v350 = vshll.u32 %v311, 16
      %v352 = vrot.slane %v350, 1
      %v353 = vsel %vm317, %v348, %v352
      %v355 = vshrl.u32 %v288, 16
      %v357 = vshll.u32 %v288, 16
      %v359 = vrot.slane %v357, 1
      %v360 = vor.u32 %v355, %v359
      %v362 = vshll.u32 %v312, 16
      %v364 = vrot.slane %v362, 1
      %v365 = vsel %vm317, %v360, %v364
      %v367 = vshrl.u32 %v289, 16
      %v369 = vshll.u32 %v289, 16
      %v371 = vrot.slane %v369, 1
      %v372 = vor.u32 %v367, %v371
      %v374 = vshll.u32 %v313, 16
      %v376 = vrot.slane %v374, 1
      %v377 = vsel %vm317, %v372, %v376
      %v379 = vshrl.u32 %v290, 16
      %v381 = vshll.u32 %v290, 16
      %v383 = vrot.slane %v381, 1
      %v384 = vor.u32 %v379, %v383
      %v386 = vshll.u32 %v314, 16
      %v388 = vrot.slane %v386, 1
      %v389 = vsel %vm317, %v384, %v388
      %v391 = vshrl.u32 %v291, 16
      %v393 = vshll.u32 %v291, 16
      %v395 = vrot.slane %v393, 1
      %v396 = vor.u32 %v391, %v395
      %v398 = vshll.u32 %v315, 16
      %v400 = vrot.slane %v398, 1
      %v401 = vsel %vm317, %v396, %v400
      %v403 = vshrl.u32 %v292, 16
      %v405 = vshll.u32 %v292, 16
      %v407 = vrot.slane %v405, 1
      %v408 = vor.u32 %v403, %v407
      %v410 = vshll.u32 %v316, 16
      %v412 = vrot.slane %v410, 1
      %v413 = vsel %vm317, %v408, %v412
      %414 = vrot.lane.b32.xlu0 %v329, 4
      %v415 = vpop.permute.xlu0 %414
      %416 = vrot.lane.b32.xlu0 %v341, 4
      %v417 = vpop.permute.xlu0 %416
      %418 = vrot.lane.b32.xlu0 %v353, 4
      %v419 = vpop.permute.xlu0 %418
      %420 = vrot.lane.b32.xlu0 %v365, 4
      %v421 = vpop.permute.xlu0 %420
      %422 = vrot.lane.b32.xlu0 %v377, 4
      %v423 = vpop.permute.xlu0 %422
      %424 = vrot.lane.b32.xlu0 %v389, 4
      %v425 = vpop.permute.xlu0 %424
      %426 = vrot.lane.b32.xlu0 %v401, 4
      %v427 = vpop.permute.xlu0 %426
      %428 = vrot.lane.b32.xlu0 %v413, 4
      %v429 = vpop.permute.xlu0 %428
      %vm430 = vcmask 1046528
      %v431 = vrot.slane %v285, 1
      %v432 = vrot.slane %v309, 1
      %v433 = vsel %vm430, %v431, %v432
      %v434 = vrot.slane %v286, 1
      %v435 = vrot.slane %v310, 1
      %v436 = vsel %vm430, %v434, %v435
      %v437 = vrot.slane %v287, 1
      %v438 = vrot.slane %v311, 1
      %v439 = vsel %vm430, %v437, %v438
      %v440 = vrot.slane %v288, 1
      %v441 = vrot.slane %v312, 1
      %v442 = vsel %vm430, %v440, %v441
      %v443 = vrot.slane %v289, 1
      %v444 = vrot.slane %v313, 1
      %v445 = vsel %vm430, %v443, %v444
      %v446 = vrot.slane %v290, 1
      %v447 = vrot.slane %v314, 1
      %v448 = vsel %vm430, %v446, %v447
      %v449 = vrot.slane %v291, 1
      %v450 = vrot.slane %v315, 1
      %v451 = vsel %vm430, %v449, %v450
      %v452 = vrot.slane %v292, 1
      %v453 = vrot.slane %v316, 1
      %v454 = vsel %vm430, %v452, %v453
      %455 = vrot.lane.b32.xlu0 %v433, 8
      %v456 = vpop.permute.xlu0 %455
      %457 = vrot.lane.b32.xlu0 %v436, 8
      %v458 = vpop.permute.xlu0 %457
      %459 = vrot.lane.b32.xlu0 %v439, 8
      %v460 = vpop.permute.xlu0 %459
      %461 = vrot.lane.b32.xlu0 %v442, 8
      %v462 = vpop.permute.xlu0 %461
      %463 = vrot.lane.b32.xlu0 %v445, 8
      %v464 = vpop.permute.xlu0 %463
      %465 = vrot.lane.b32.xlu0 %v448, 8
      %v466 = vpop.permute.xlu0 %465
      %467 = vrot.lane.b32.xlu0 %v451, 8
      %v468 = vpop.permute.xlu0 %467
      %469 = vrot.lane.b32.xlu0 %v454, 8
      %v470 = vpop.permute.xlu0 %469
      %v473 = vunpack.c.l.b16 %v247
      %v474 = vunpack.c.l.b16 %v248
      %v475 = vpack.c.b16 %v474, %v473
      %476 = vrot.lane.b32.xlu0 %v286, 12
      %v477 = vpop.permute.xlu0 %476
      %478 = vrot.lane.b32.xlu0 %v287, 12
      %v479 = vpop.permute.xlu0 %478
      %480 = vrot.lane.b32.xlu0 %v288, 12
      %v481 = vpop.permute.xlu0 %480
      %482 = vrot.lane.b32.xlu0 %v289, 12
      %v483 = vpop.permute.xlu0 %482
      %484 = vrot.lane.b32.xlu0 %v290, 12
      %v485 = vpop.permute.xlu0 %484
      %486 = vrot.lane.b32.xlu0 %v291, 12
      %v487 = vpop.permute.xlu0 %486
      %488 = vrot.lane.b32.xlu0 %v292, 12
      %v489 = vpop.permute.xlu0 %488
      %490 = vrot.lane.b32.xlu0 %v475, 12
      %v491 = vpop.permute.xlu0 %490
      %v493 = vunpack.c.l.b16 %v249
      %v494 = vpack.c.b16 %v493, %v493
      %v496 = vshrl.u32 %v475, 16
      %v498 = vshll.u32 %v475, 16
      %v500 = vrot.slane %v498, 1
      %v501 = vor.u32 %v496, %v500
      %v503 = vshll.u32 %v494, 16
      %v505 = vrot.slane %v503, 1
      %v506 = vsel %vm317, %v501, %v505
      %507 = vrot.lane.b32.xlu0 %v341, 16
      %v508 = vpop.permute.xlu0 %507
      %509 = vrot.lane.b32.xlu0 %v353, 16
      %v510 = vpop.permute.xlu0 %509
      %511 = vrot.lane.b32.xlu0 %v365, 16
      %v512 = vpop.permute.xlu0 %511
      %513 = vrot.lane.b32.xlu0 %v377, 16
      %v514 = vpop.permute.xlu0 %513
      %515 = vrot.lane.b32.xlu0 %v389, 16
      %v516 = vpop.permute.xlu0 %515
      %517 = vrot.lane.b32.xlu0 %v401, 16
      %v518 = vpop.permute.xlu0 %517
      %519 = vrot.lane.b32.xlu0 %v413, 16
      %v520 = vpop.permute.xlu0 %519
      %521 = vrot.lane.b32.xlu0 %v506, 16
      %v522 = vpop.permute.xlu0 %521
      %v523 = vrot.slane %v475, 1
      %v524 = vrot.slane %v494, 1
      %v525 = vsel %vm430, %v523, %v524
      %526 = vrot.lane.b32.xlu0 %v436, 20
      %v527 = vpop.permute.xlu0 %526
      %528 = vrot.lane.b32.xlu0 %v439, 20
      %v529 = vpop.permute.xlu0 %528
      %530 = vrot.lane.b32.xlu0 %v442, 20
      %v531 = vpop.permute.xlu0 %530
      %532 = vrot.lane.b32.xlu0 %v445, 20
      %v533 = vpop.permute.xlu0 %532
      %534 = vrot.lane.b32.xlu0 %v448, 20
      %v535 = vpop.permute.xlu0 %534
      %536 = vrot.lane.b32.xlu0 %v451, 20
      %v537 = vpop.permute.xlu0 %536
      %538 = vrot.lane.b32.xlu0 %v454, 20
      %v539 = vpop.permute.xlu0 %538
      %540 = vrot.lane.b32.xlu0 %v525, 20
      %v541 = vpop.permute.xlu0 %540
      %v544 = vunpack.c.l.b16 %v250
      %v545 = vunpack.c.l.b16 %v251
      %v546 = vpack.c.b16 %v545, %v544
      %547 = vrot.lane.b32.xlu0 %v287, 24
      %v548 = vpop.permute.xlu0 %547
      %549 = vrot.lane.b32.xlu0 %v288, 24
      %v550 = vpop.permute.xlu0 %549
      %551 = vrot.lane.b32.xlu0 %v289, 24
      %v552 = vpop.permute.xlu0 %551
      %553 = vrot.lane.b32.xlu0 %v290, 24
      %v554 = vpop.permute.xlu0 %553
      %555 = vrot.lane.b32.xlu0 %v291, 24
      %v556 = vpop.permute.xlu0 %555
      %557 = vrot.lane.b32.xlu0 %v292, 24
      %v558 = vpop.permute.xlu0 %557
      %559 = vrot.lane.b32.xlu0 %v475, 24
      %v560 = vpop.permute.xlu0 %559
      %561 = vrot.lane.b32.xlu0 %v546, 24
      %v562 = vpop.permute.xlu0 %561
      %v564 = vunpack.c.l.b16 %v252
      %v565 = vpack.c.b16 %v564, %v564
      %v567 = vshrl.u32 %v546, 16
      %v569 = vshll.u32 %v546, 16
      %v571 = vrot.slane %v569, 1
      %v572 = vor.u32 %v567, %v571
      %v574 = vshll.u32 %v565, 16
      %v576 = vrot.slane %v574, 1
      %v577 = vsel %vm317, %v572, %v576
      %578 = vrot.lane.b32.xlu0 %v353, 28
      %v579 = vpop.permute.xlu0 %578
      %580 = vrot.lane.b32.xlu0 %v365, 28
      %v581 = vpop.permute.xlu0 %580
      %582 = vrot.lane.b32.xlu0 %v377, 28
      %v583 = vpop.permute.xlu0 %582
      %584 = vrot.lane.b32.xlu0 %v389, 28
      %v585 = vpop.permute.xlu0 %584
      %586 = vrot.lane.b32.xlu0 %v401, 28
      %v587 = vpop.permute.xlu0 %586
      %588 = vrot.lane.b32.xlu0 %v413, 28
      %v589 = vpop.permute.xlu0 %588
      %590 = vrot.lane.b32.xlu0 %v506, 28
      %v591 = vpop.permute.xlu0 %590
      %592 = vrot.lane.b32.xlu0 %v577, 28
      %v593 = vpop.permute.xlu0 %592
      %v594 = vrot.slane %v546, 1
      %v595 = vrot.slane %v565, 1
      %v596 = vsel %vm430, %v594, %v595
      %597 = vrot.lane.b32.xlu0 %v439, 32
      %v598 = vpop.permute.xlu0 %597
      %599 = vrot.lane.b32.xlu0 %v442, 32
      %v600 = vpop.permute.xlu0 %599
      %601 = vrot.lane.b32.xlu0 %v445, 32
      %v602 = vpop.permute.xlu0 %601
      %603 = vrot.lane.b32.xlu0 %v448, 32
      %v604 = vpop.permute.xlu0 %603
      %605 = vrot.lane.b32.xlu0 %v451, 32
      %v606 = vpop.permute.xlu0 %605
      %607 = vrot.lane.b32.xlu0 %v454, 32
      %v608 = vpop.permute.xlu0 %607
      %609 = vrot.lane.b32.xlu0 %v525, 32
      %v610 = vpop.permute.xlu0 %609
      %611 = vrot.lane.b32.xlu0 %v596, 32
      %v612 = vpop.permute.xlu0 %611
      %vm613 = vcmask 31744
      %v615 = vsel %vm613, %v285, %v415
      %v617 = vsel %vm613, %v286, %v417
      %v619 = vsel %vm613, %v287, %v419
      %v621 = vsel %vm613, %v288, %v421
      %v623 = vsel %vm613, %v289, %v423
      %v625 = vsel %vm613, %v290, %v425
      %v627 = vsel %vm613, %v291, %v427
      %v629 = vsel %vm613, %v292, %v429
      %vm630 = vcmask 64512
      %v632 = vsel %vm630, %v615, %v456
      %v634 = vsel %vm630, %v617, %v458
      %v636 = vsel %vm630, %v619, %v460
      %v638 = vsel %vm630, %v621, %v462
      %v640 = vsel %vm630, %v623, %v464
      %v642 = vsel %vm630, %v625, %v466
      %v644 = vsel %vm630, %v627, %v468
      %v646 = vsel %vm630, %v629, %v470
      %vm647 = vcmask 97280
      %v649 = vsel %vm647, %v632, %v477
      %v651 = vsel %vm647, %v634, %v479
      %v653 = vsel %vm647, %v636, %v481
      %v655 = vsel %vm647, %v638, %v483
      %v657 = vsel %vm647, %v640, %v485
      %v659 = vsel %vm647, %v642, %v487
      %v661 = vsel %vm647, %v644, %v489
      %v663 = vsel %vm647, %v646, %v491
      %vm664 = vcmask 130048
      %v666 = vsel %vm664, %v649, %v508
      %v668 = vsel %vm664, %v651, %v510
      %v670 = vsel %vm664, %v653, %v512
      %v672 = vsel %vm664, %v655, %v514
      %v674 = vsel %vm664, %v657, %v516
      %v676 = vsel %vm664, %v659, %v518
      %v678 = vsel %vm664, %v661, %v520
      %v680 = vsel %vm664, %v663, %v522
      %vm681 = vcmask 162816
      %v683 = vsel %vm681, %v666, %v527
      %v685 = vsel %vm681, %v668, %v529
      %v687 = vsel %vm681, %v670, %v531
      %v689 = vsel %vm681, %v672, %v533
      %v691 = vsel %vm681, %v674, %v535
      %v693 = vsel %vm681, %v676, %v537
      %v695 = vsel %vm681, %v678, %v539
      %v697 = vsel %vm681, %v680, %v541
      %vm698 = vcmask 195584
      %v700 = vsel %vm698, %v683, %v548
      %v702 = vsel %vm698, %v685, %v550
      %v704 = vsel %vm698, %v687, %v552
      %v706 = vsel %vm698, %v689, %v554
      %v708 = vsel %vm698, %v691, %v556
      %v710 = vsel %vm698, %v693, %v558
      %v712 = vsel %vm698, %v695, %v560
      %v714 = vsel %vm698, %v697, %v562
      %vm715 = vcmask 228352
      %v717 = vsel %vm715, %v700, %v579
      %v719 = vsel %vm715, %v702, %v581
      %v721 = vsel %vm715, %v704, %v583
      %v723 = vsel %vm715, %v706, %v585
      %v725 = vsel %vm715, %v708, %v587
      %v727 = vsel %vm715, %v710, %v589
      %v729 = vsel %vm715, %v712, %v591
      %v731 = vsel %vm715, %v714, %v593
      %vm732 = vcmask 261120
      %v734 = vsel %vm732, %v717, %v598
      %v736 = vsel %vm732, %v719, %v600
      %v738 = vsel %vm732, %v721, %v602
      %v740 = vsel %vm732, %v723, %v604
      %v742 = vsel %vm732, %v725, %v606
      %v744 = vsel %vm732, %v727, %v608
      %v746 = vsel %vm732, %v729, %v610
      %v748 = vsel %vm732, %v731, %v612
      %v749 = vld [vmem:[%s1] sm:$0xf]
      %vm750 = vcmask 293888
      %v752 = vsel %vm750, %v749, 0
      %v754 = vsel %vm750, %v734, 0
      %v756 = vsel %vm750, %v736, 0
      %v758 = vsel %vm750, %v738, 0
      %v760 = vsel %vm750, %v740, 0
      %v762 = vsel %vm750, %v742, 0
      %v764 = vsel %vm750, %v744, 0
      %v766 = vsel %vm750, %v746, 0
      %v768 = vsel %vm750, %v748, 0
      %770 = vmatprep.subr.bf16.mxu0 0
      %771 = vmatpush1.bf16.xpose.msra.mxu0 %v754
      %772 = vmatprep.subr.bf16.mxu0 0
      %773 = vmatpush1.bf16.xpose.msra.mxu0 %v756
      %774 = vmatprep.subr.bf16.mxu0 0
      %775 = vmatpush1.bf16.xpose.msra.mxu0 %v758
      %776 = vmatprep.subr.bf16.mxu0 0
      %777 = vmatpush1.bf16.xpose.msra.mxu0 %v760
      %778 = vmatprep.subr.bf16.mxu0 0
      %779 = vmatpush1.bf16.xpose.msra.mxu0 %v762
      %780 = vmatprep.subr.bf16.mxu0 0
      %781 = vmatpush1.bf16.xpose.msra.mxu0 %v764
      %782 = vmatprep.subr.bf16.mxu0 0
      %783 = vmatpush1.bf16.xpose.msra.mxu0 %v766
      %784 = vmatprep.subr.bf16.mxu0 0
      %785 = vmatpush1.bf16.xpose.msra.mxu0 %v768
      %786 = vmatprep.subr.bf16.mxu0 0
      %787 = vmatpush1.bf16.xpose.msra.mxu0 0
      %788 = vmatprep.subr.bf16.mxu0 0
      %789 = vmatpush1.bf16.xpose.msra.mxu0 0
      %790 = vmatprep.subr.bf16.mxu0 0
      %791 = vmatpush1.bf16.xpose.msra.mxu0 0
      %792 = vmatprep.subr.bf16.mxu0 0
      %793 = vmatpush1.bf16.xpose.msra.mxu0 0
      %794 = vmatprep.subr.bf16.mxu0 0
      %795 = vmatpush1.bf16.xpose.msra.mxu0 0
      %796 = vmatprep.subr.bf16.mxu0 0
      %797 = vmatpush1.bf16.xpose.msra.mxu0 0
      %798 = vmatprep.subr.bf16.mxu0 0
      %799 = vmatpush1.bf16.xpose.msra.mxu0 0
      %800 = vmatprep.subr.bf16.mxu0 0
      %801 = vmatpush1.bf16.xpose.msra.mxu0 0
      %802 = vmatprep.mubr.bf16.mxu0 0
      %803 = vmatmul.mubr.bf16.gmra.mrb[0].mxu0 %v752
      %v804 = vpop.f32.mrb[0].mxu0
      %v805 = vadd.f32 0.0, %v804
      %v806 = vpop.f32.mrb[0].mxu0
      %v807 = vpop.f32.mrb[0].mxu0
      %v808 = vpop.f32.mrb[0].mxu0
      %809 = vdwg.mxu0
      %v810 = vld [vmem:[%s2] sm:$0xff]
      %812 = vset.pattern.permute.xlu0 0
      %813 = vperm.xlu0 %812, %v810
      %v814 = vpop.permute.xlu0 %813
      %v816 = vmul.f32 %v805, %v814
      %v817 = vld [vmem:[%s3] sm:$0xff]
      %819 = vset.pattern.permute.xlu0 0
      %820 = vperm.xlu0 %819, %v817
      %v821 = vpop.permute.xlu0 %820
      %v823 = vadd.f32 %v816, %v821
      %v824 = vmax.f32 %v823, 0.0
      %825 = vst [vmem:[%s217] sm:$0xff] %v824
      %p826 = scmp.lt.s32.totalorder %s19, 1
      %s827 = scalar_select %p826, %s19, 1
      %p828 = scmp.lt.s32.totalorder %s20, 1
      %s829 = scalar_select %p828, %s20, 1
      %s830 = smul.addr %s827, 2
      %s831 = sadd.s32 %s829, %s830
      %s832 = smul.addr %s831, 8
      %s833 = scalar_lea.vmem %s4, %s832
      // Predicated region
      $region37: #{conv_layer_forward.3} parent=35 // pred_check
        %p834 = pneg %p136
      $region38: #{conv_layer_forward.3} parent=35 // pred_check_branch
        %836 = sbr.rel (%p834) target = $region40
      $region39: #{conv_layer_forward.3} parent=35 // pred_region
        _
      $region40: #{conv_layer_forward.3} parent=35 // pred_fallthru
        _
    $region36: #{conv_layer_forward.3} parent=5 // pred_fallthru
      _
    %p837 = scmp.le.s32.totalorder 2, %s10
    // Predicated region
    $region41: #{conv_layer_forward.3} parent=5 // pred_check
      %p838 = pneg %p837
    $region42: #{conv_layer_forward.3} parent=5 // pred_check_branch
      %840 = sbr.rel (%p838) target = $region44
    $region43: #{conv_layer_forward.3} parent=5 // pred_region
      %s841 = ssub.s32 %s10, 2
      // Predicated region
      $region45: #{conv_layer_forward.3} parent=43 // pred_check
        %p842 = pneg %p142
      $region46: #{conv_layer_forward.3} parent=43 // pred_check_branch
        %844 = sbr.rel (%p842) target = $region48
      $region47: #{conv_layer_forward.3} parent=43 // pred_region
        %p845 = scmp.lt.s32.totalorder %s21, 1
        %s846 = scalar_select %p845, %s21, 1
        %p847 = scmp.lt.s32.totalorder %s22, 1
        %s848 = scalar_select %p847, %s22, 1
        %s849 = smul.addr %s846, 2
        %s850 = sadd.s32 %s848, %s849
        %s851 = smul.addr %s850, 8
        %s852 = scalar_lea.vmem %s4, %s851
      $region48: #{conv_layer_forward.3} parent=43 // pred_fallthru
        _
    $region44: #{conv_layer_forward.3} parent=5 // pred_fallthru
      _
  $region6: #{conv_layer_forward.3} parent=0 // loop_footer
    %s14 = sadd.s32 1, %s10
  $region7: #{conv_layer_forward.3} parent=0 // loop_footer_branch
    %9 = sbr.rel target = $region3
  $region8: #{conv_layer_forward.3} parent=0 // loop_exit
    _

// kernel: conv_layer_forward.2
$region0: #{conv_layer_forward.2}
  #allocation0 [shape = 'u32[]', space=smem, size = 0x4, offset = 0x4, fixed_abs, tag = 'smem constant byte address 0x4 - core index']
  #allocation1 [shape = 'u32[144,128]{1,0:T(1,128)}', space=vmem, size = 0x12000, scoped, tag = 'internal scratch']
  %s0 = inlined_call_operand.vmem [shape: bf16[2,18,18,4], index: 0, kind: input, shape index: {}]
  %s1 = inlined_call_operand.vmem [shape: bf16[8,36], index: 1, kind: input, shape index: {}]
  %s2 = inlined_call_operand.vmem [shape: f32[2,8,2], index: 2, kind: output, shape index: {}]
  %s3 = sld [smem:[#allocation0]]
  $region45: #{conv_layer_forward.2} parent=0
    _
  %s5 = ssub.s32 1, %s3
  %s6 = scalar_select 0, %s5, %s3
  loop: start=0, step=1, limit=6
  $region2: #{conv_layer_forward.2} parent=0 // loop_pre_header
    _
  $region3: #{conv_layer_forward.2} parent=0 // loop_header
    %s8 = sphi 0, %s12
    %p9 = scmp.ge.s32.totalorder %s8, 6
    %s15 = sphi 0, %s27
    %s16 = sphi 0, %s23
    %s17 = sphi 0, %s15
    %s18 = sphi 0, %s16
    %s19 = sphi 0, %s17
    %s20 = sphi 0, %s18
    %s30 = sphi 0, %s32
    %s33 = sphi 0, %s30
    %s34 = sphi 0, %s33
    %s50 = sphi 0, %s34
    %s54 = sphi 0, %s54
    %s56 = sphi 0, %s54
    %s57 = sphi 0, %s56
    %s71 = sphi 0, %s57
    %s77 = sphi 0, %s79
    %s80 = sphi 0, %s77
    %s81 = sphi 0, %s80
    %s97 = sphi 0, %s81
  $region4: #{conv_layer_forward.2} parent=0 // loop_header_branch
    %11 = sbr.rel (%p9) target = $region8
  $region5: #{conv_layer_forward.2} parent=0 // loop_body
    %s13 = ssub.s32 %s8, 1
    %s14 = ssub.s32 %s8, 2
    %s21 = sadd.s32 1, %s16
    %p22 = scmp.ge.s32.totalorder %s21, 2
    %s23 = scalar_select %p22, 0, %s21
    %s24 = sadd.s32 1, %s15
    %s25 = scalar_select %p22, %s24, %s15
    %p26 = scmp.ge.s32.totalorder %s25, 2
    %s27 = scalar_select %p26, 0, %s25
    %s28 = ssub.s32 %s15, %s27
    %p29 = scmp.eq.s32.totalorder %s28, 0
    %s31 = sadd.s32 %s30, 1
    %s32 = scalar_select %p29, %s30, %s31
    %p35 = pneg %p29
    %p36 = scmp.eq.s32.totalorder %s8, 3
    %p37 = por %p35, %p36
    %p38 = scmp.ne.s32.totalorder %s30, %s33
    %p39 = scmp.eq.s32.totalorder %s8, 0
    %p40 = por %p38, %p39
    %p41 = scmp.ne.s32.totalorder %s30, %s33
    %p42 = scmp.eq.s32.totalorder %s13, 3
    %p43 = por %p41, %p42
    %p44 = scmp.ne.s32.totalorder %s33, %s34
    %p45 = scmp.eq.s32.totalorder %s13, 0
    %p46 = por %p44, %p45
    %p47 = scmp.ne.s32.totalorder %s33, %s34
    %p48 = scmp.eq.s32.totalorder %s14, 3
    %p49 = por %p47, %p48
    %p51 = scmp.ne.s32.totalorder %s34, %s50
    %p52 = scmp.eq.s32.totalorder %s14, 0
    %p53 = por %p51, %p52
    %s55 = sadd.s32 %s54, 1
    %p58 = scmp.eq.s32.totalorder %s8, 3
    %p59 = scmp.ne.s32.totalorder %s54, %s56
    %p60 = scmp.eq.s32.totalorder %s8, 0
    %p61 = por %p59, %p60
    %p62 = scmp.ne.s32.totalorder %s54, %s56
    %p63 = scmp.eq.s32.totalorder %s13, 3
    %p64 = por %p62, %p63
    %p65 = scmp.ne.s32.totalorder %s56, %s57
    %p66 = scmp.eq.s32.totalorder %s13, 0
    %p67 = por %p65, %p66
    %p68 = scmp.ne.s32.totalorder %s56, %s57
    %p69 = scmp.eq.s32.totalorder %s14, 3
    %p70 = por %p68, %p69
    %p72 = scmp.ne.s32.totalorder %s57, %s71
    %p73 = scmp.eq.s32.totalorder %s14, 0
    %p74 = por %p72, %p73
    %s75 = ssub.s32 %s15, %s27
    %p76 = scmp.eq.s32.totalorder %s75, 0
    %s78 = sadd.s32 %s77, 1
    %s79 = scalar_select %p76, %s77, %s78
    %p82 = pneg %p76
    %p83 = scmp.eq.s32.totalorder %s8, 3
    %p84 = por %p82, %p83
    %p85 = scmp.ne.s32.totalorder %s77, %s80
    %p86 = scmp.eq.s32.totalorder %s8, 0
    %p87 = por %p85, %p86
    %p88 = scmp.ne.s32.totalorder %s77, %s80
    %p89 = scmp.eq.s32.totalorder %s13, 3
    %p90 = por %p88, %p89
    %p91 = scmp.ne.s32.totalorder %s80, %s81
    %p92 = scmp.eq.s32.totalorder %s13, 0
    %p93 = por %p91, %p92
    %p94 = scmp.ne.s32.totalorder %s80, %s81
    %p95 = scmp.eq.s32.totalorder %s14, 3
    %p96 = por %p94, %p95
    %p98 = scmp.ne.s32.totalorder %s81, %s97
    %p99 = scmp.eq.s32.totalorder %s14, 0
    %p100 = por %p98, %p99
    %p101 = scmp.le.s32.totalorder 1, %s8
    %p102 = scmp.lt.s32.totalorder %s8, 5
    %p103 = pnand %p101, %p102
    %p104 = pneg %p103
    // Predicated region
    $region9: #{conv_layer_forward.2} parent=5 // pred_check
      _
    $region10: #{conv_layer_forward.2} parent=5 // pred_check_branch
      %106 = sbr.rel (%p103) target = $region12
    $region11: #{conv_layer_forward.2} parent=5 // pred_region
      %s107 = ssub.s32 %s8, 1
      // Predicated region
      $region13: #{conv_layer_forward.2} parent=11 // pred_check
        %p108 = pneg %p67
      $region14: #{conv_layer_forward.2} parent=11 // pred_check_branch
        %110 = sbr.rel (%p108) target = $region16
      $region15: #{conv_layer_forward.2} parent=11 // pred_region
        _
      $region16: #{conv_layer_forward.2} parent=11 // pred_fallthru
        _
    $region12: #{conv_layer_forward.2} parent=5 // pred_fallthru
      _
    %p111 = scmp.lt.s32.totalorder %s8, 4
    // Predicated region
    $region17: #{conv_layer_forward.2} parent=5 // pred_check
      %p112 = pneg %p111
    $region18: #{conv_layer_forward.2} parent=5 // pred_check_branch
      %114 = sbr.rel (%p112) target = $region20
    $region19: #{conv_layer_forward.2} parent=5 // pred_region
      // Predicated region
      $region21: #{conv_layer_forward.2} parent=19 // pred_check
        %p115 = pneg %p40
      $region22: #{conv_layer_forward.2} parent=19 // pred_check_branch
        %117 = sbr.rel (%p115) target = $region24
      $region23: #{conv_layer_forward.2} parent=19 // pred_region
        %p118 = scmp.lt.s32.totalorder %s15, 1
        %s119 = scalar_select %p118, %s15, 1
        %s120 = smul.addr %s119, 54
        %s121 = smul.addr %s120, 4
        %s122 = scalar_lea.vmem %s0, %s121
      $region24: #{conv_layer_forward.2} parent=19 // pred_fallthru
        _
    $region20: #{conv_layer_forward.2} parent=5 // pred_fallthru
      _
    %p123 = scmp.le.s32.totalorder 1, %s8
    %p124 = scmp.lt.s32.totalorder %s8, 5
    %p125 = pnand %p123, %p124
    %p126 = pneg %p125
    // Predicated region
    $region25: #{conv_layer_forward.2} parent=5 // pred_check
      _
    $region26: #{conv_layer_forward.2} parent=5 // pred_check_branch
      %128 = sbr.rel (%p125) target = $region28
    $region27: #{conv_layer_forward.2} parent=5 // pred_region
      %s129 = ssub.s32 %s8, 1
      %p130 = scmp.lt.s32.totalorder %s17, 1
      %s131 = scalar_select %p130, %s17, 1
      %s132 = smul.addr %s131, 54
      %s133 = smul.addr %s132, 4
      %s134 = scalar_lea.vmem %s0, %s133
      %p135 = pneg %p46
      %p136 = pneg %p43
      %p137 = pneg %p67
      %p138 = pneg %p64
      %p139 = pneg %p93
      %p140 = pneg %p90
      %p141 = scmp.lt.s32.totalorder %s17, 1
      %s142 = scalar_select %p141, %s17, 1
      %s143 = smul.addr %s142, 8
      %s144 = scalar_lea.vmem %s2, %s143
      %p145 = scmp.lt.s32.totalorder %s17, 1
      %s146 = scalar_select %p145, %s17, 1
      %s147 = smul.addr %s146, 54
      %s148 = smul.addr %s147, 4
      %s149 = scalar_lea.vmem %s0, %s148
      %p150 = scmp.lt.s32.totalorder %s17, 1
      %s151 = scalar_select %p150, %s17, 1
      %s152 = smul.addr %s151, 8
      %s153 = scalar_lea.vmem %s2, %s152
      %s155 = smul.u32 %s18, 8
      %s156 = smul.u32 %s155, 3
      %s157 = smul.addr %s156, 4
      %s158 = scalar_lea.vmem %s149, %s157
      %v159 = vld [vmem:[%s158] sm:$0xf]
      %v160 = vld [vmem:[%s158 + $0x4] sm:$0xf]
      %v161 = vld [vmem:[%s158 + $0x8] sm:$0x1]
      %v162 = vld [vmem:[%s158 + $0xc] sm:$0xf]
      %v163 = vld [vmem:[%s158 + $0x10] sm:$0xf]
      %v164 = vld [vmem:[%s158 + $0x14] sm:$0x1]
      %v165 = vld [vmem:[%s158 + $0x18] sm:$0xf]
      %v166 = vld [vmem:[%s158 + $0x1c] sm:$0xf]
      %v167 = vld [vmem:[%s158 + $0x20] sm:$0x1]
      %v168 = vld [vmem:[%s158 + $0x24] sm:$0xf]
      %v169 = vld [vmem:[%s158 + $0x28] sm:$0xf]
      %v170 = vld [vmem:[%s158 + $0x2c] sm:$0x1]
      %v171 = vld [vmem:[%s158 + $0x30] sm:$0xf]
      %v172 = vld [vmem:[%s158 + $0x34] sm:$0xf]
      %v173 = vld [vmem:[%s158 + $0x38] sm:$0x1]
      %v174 = vld [vmem:[%s158 + $0x3c] sm:$0xf]
      %v175 = vld [vmem:[%s158 + $0x40] sm:$0xf]
      %v176 = vld [vmem:[%s158 + $0x44] sm:$0x1]
      %v177 = vld [vmem:[%s158 + $0x48] sm:$0xf]
      %v178 = vld [vmem:[%s158 + $0x4c] sm:$0xf]
      %v179 = vld [vmem:[%s158 + $0x50] sm:$0x1]
      %v180 = vld [vmem:[%s158 + $0x54] sm:$0xf]
      %v181 = vld [vmem:[%s158 + $0x58] sm:$0xf]
      %v182 = vld [vmem:[%s158 + $0x5c] sm:$0x1]
      %v183 = vld [vmem:[%s158 + $0x60] sm:$0xf]
      %v184 = vld [vmem:[%s158 + $0x64] sm:$0xf]
      %v185 = vld [vmem:[%s158 + $0x68] sm:$0x1]
      %v186 = vld [vmem:[%s158 + $0x6c] sm:$0xf]
      %v187 = vld [vmem:[%s158 + $0x70] sm:$0xf]
      %v188 = vld [vmem:[%s158 + $0x74] sm:$0x1]
      %v205 = vunpack.c.l.b16 %v159
      %v206 = vunpack.c.l.b16 %v160
      %v207 = vunpack.c.l.b16 %v162
      %v208 = vunpack.c.l.b16 %v163
      %v209 = vunpack.c.l.b16 %v165
      %v210 = vunpack.c.l.b16 %v166
      %v211 = vunpack.c.l.b16 %v168
      %v212 = vunpack.c.l.b16 %v169
      %v213 = vunpack.c.l.b16 %v171
      %v214 = vunpack.c.l.b16 %v172
      %v215 = vunpack.c.l.b16 %v174
      %v216 = vunpack.c.l.b16 %v175
      %v217 = vunpack.c.l.b16 %v177
      %v218 = vunpack.c.l.b16 %v178
      %v219 = vunpack.c.l.b16 %v180
      %v220 = vunpack.c.l.b16 %v181
      %v221 = vpack.c.b16 %v206, %v205
      %v222 = vpack.c.b16 %v208, %v207
      %v223 = vpack.c.b16 %v210, %v209
      %v224 = vpack.c.b16 %v212, %v211
      %v225 = vpack.c.b16 %v214, %v213
      %v226 = vpack.c.b16 %v216, %v215
      %v227 = vpack.c.b16 %v218, %v217
      %v228 = vpack.c.b16 %v220, %v219
      %v237 = vunpack.c.l.b16 %v161
      %v238 = vunpack.c.l.b16 %v164
      %v239 = vunpack.c.l.b16 %v167
      %v240 = vunpack.c.l.b16 %v170
      %v241 = vunpack.c.l.b16 %v173
      %v242 = vunpack.c.l.b16 %v176
      %v243 = vunpack.c.l.b16 %v179
      %v244 = vunpack.c.l.b16 %v182
      %v245 = vpack.c.b16 %v237, %v237
      %v246 = vpack.c.b16 %v238, %v238
      %v247 = vpack.c.b16 %v239, %v239
      %v248 = vpack.c.b16 %v240, %v240
      %v249 = vpack.c.b16 %v241, %v241
      %v250 = vpack.c.b16 %v242, %v242
      %v251 = vpack.c.b16 %v243, %v243
      %v252 = vpack.c.b16 %v244, %v244
      %vm253 = vsmask.f32 7424
      %v255 = vshrl.u32 %v221, 16
      %v257 = vshll.u32 %v221, 16
      %v259 = vrot.slane %v257, 1
      %v260 = vor.u32 %v255, %v259
      %v262 = vshll.u32 %v245, 16
      %v264 = vrot.slane %v262, 1
      %v265 = vsel %vm253, %v260, %v264
      %v267 = vshrl.u32 %v222, 16
      %v269 = vshll.u32 %v222, 16
      %v271 = vrot.slane %v269, 1
      %v272 = vor.u32 %v267, %v271
      %v274 = vshll.u32 %v246, 16
      %v276 = vrot.slane %v274, 1
      %v277 = vsel %vm253, %v272, %v276
      %v279 = vshrl.u32 %v223, 16
      %v281 = vshll.u32 %v223, 16
      %v283 = vrot.slane %v281, 1
      %v284 = vor.u32 %v279, %v283
      %v286 = vshll.u32 %v247, 16
      %v288 = vrot.slane %v286, 1
      %v289 = vsel %vm253, %v284, %v288
      %v291 = vshrl.u32 %v224, 16
      %v293 = vshll.u32 %v224, 16
      %v295 = vrot.slane %v293, 1
      %v296 = vor.u32 %v291, %v295
      %v298 = vshll.u32 %v248, 16
      %v300 = vrot.slane %v298, 1
      %v301 = vsel %vm253, %v296, %v300
      %v303 = vshrl.u32 %v225, 16
      %v305 = vshll.u32 %v225, 16
      %v307 = vrot.slane %v305, 1
      %v308 = vor.u32 %v303, %v307
      %v310 = vshll.u32 %v249, 16
      %v312 = vrot.slane %v310, 1
      %v313 = vsel %vm253, %v308, %v312
      %v315 = vshrl.u32 %v226, 16
      %v317 = vshll.u32 %v226, 16
      %v319 = vrot.slane %v317, 1
      %v320 = vor.u32 %v315, %v319
      %v322 = vshll.u32 %v250, 16
      %v324 = vrot.slane %v322, 1
      %v325 = vsel %vm253, %v320, %v324
      %v327 = vshrl.u32 %v227, 16
      %v329 = vshll.u32 %v227, 16
      %v331 = vrot.slane %v329, 1
      %v332 = vor.u32 %v327, %v331
      %v334 = vshll.u32 %v251, 16
      %v336 = vrot.slane %v334, 1
      %v337 = vsel %vm253, %v332, %v336
      %v339 = vshrl.u32 %v228, 16
      %v341 = vshll.u32 %v228, 16
      %v343 = vrot.slane %v341, 1
      %v344 = vor.u32 %v339, %v343
      %v346 = vshll.u32 %v252, 16
      %v348 = vrot.slane %v346, 1
      %v349 = vsel %vm253, %v344, %v348
      %350 = vrot.lane.b32.xlu0 %v265, 4
      %v351 = vpop.permute.xlu0 %350
      %352 = vrot.lane.b32.xlu0 %v277, 4
      %v353 = vpop.permute.xlu0 %352
      %354 = vrot.lane.b32.xlu0 %v289, 4
      %v355 = vpop.permute.xlu0 %354
      %356 = vrot.lane.b32.xlu0 %v301, 4
      %v357 = vpop.permute.xlu0 %356
      %358 = vrot.lane.b32.xlu0 %v313, 4
      %v359 = vpop.permute.xlu0 %358
      %360 = vrot.lane.b32.xlu0 %v325, 4
      %v361 = vpop.permute.xlu0 %360
      %362 = vrot.lane.b32.xlu0 %v337, 4
      %v363 = vpop.permute.xlu0 %362
      %364 = vrot.lane.b32.xlu0 %v349, 4
      %v365 = vpop.permute.xlu0 %364
      %vm366 = vcmask 1046528
      %v367 = vrot.slane %v221, 1
      %v368 = vrot.slane %v245, 1
      %v369 = vsel %vm366, %v367, %v368
      %v370 = vrot.slane %v222, 1
      %v371 = vrot.slane %v246, 1
      %v372 = vsel %vm366, %v370, %v371
      %v373 = vrot.slane %v223, 1
      %v374 = vrot.slane %v247, 1
      %v375 = vsel %vm366, %v373, %v374
      %v376 = vrot.slane %v224, 1
      %v377 = vrot.slane %v248, 1
      %v378 = vsel %vm366, %v376, %v377
      %v379 = vrot.slane %v225, 1
      %v380 = vrot.slane %v249, 1
      %v381 = vsel %vm366, %v379, %v380
      %v382 = vrot.slane %v226, 1
      %v383 = vrot.slane %v250, 1
      %v384 = vsel %vm366, %v382, %v383
      %v385 = vrot.slane %v227, 1
      %v386 = vrot.slane %v251, 1
      %v387 = vsel %vm366, %v385, %v386
      %v388 = vrot.slane %v228, 1
      %v389 = vrot.slane %v252, 1
      %v390 = vsel %vm366, %v388, %v389
      %391 = vrot.lane.b32.xlu0 %v369, 8
      %v392 = vpop.permute.xlu0 %391
      %393 = vrot.lane.b32.xlu0 %v372, 8
      %v394 = vpop.permute.xlu0 %393
      %395 = vrot.lane.b32.xlu0 %v375, 8
      %v396 = vpop.permute.xlu0 %395
      %397 = vrot.lane.b32.xlu0 %v378, 8
      %v398 = vpop.permute.xlu0 %397
      %399 = vrot.lane.b32.xlu0 %v381, 8
      %v400 = vpop.permute.xlu0 %399
      %401 = vrot.lane.b32.xlu0 %v384, 8
      %v402 = vpop.permute.xlu0 %401
      %403 = vrot.lane.b32.xlu0 %v387, 8
      %v404 = vpop.permute.xlu0 %403
      %405 = vrot.lane.b32.xlu0 %v390, 8
      %v406 = vpop.permute.xlu0 %405
      %v409 = vunpack.c.l.b16 %v183
      %v410 = vunpack.c.l.b16 %v184
      %v411 = vpack.c.b16 %v410, %v409
      %412 = vrot.lane.b32.xlu0 %v222, 12
      %v413 = vpop.permute.xlu0 %412
      %414 = vrot.lane.b32.xlu0 %v223, 12
      %v415 = vpop.permute.xlu0 %414
      %416 = vrot.lane.b32.xlu0 %v224, 12
      %v417 = vpop.permute.xlu0 %416
      %418 = vrot.lane.b32.xlu0 %v225, 12
      %v419 = vpop.permute.xlu0 %418
      %420 = vrot.lane.b32.xlu0 %v226, 12
      %v421 = vpop.permute.xlu0 %420
      %422 = vrot.lane.b32.xlu0 %v227, 12
      %v423 = vpop.permute.xlu0 %422
      %424 = vrot.lane.b32.xlu0 %v228, 12
      %v425 = vpop.permute.xlu0 %424
      %426 = vrot.lane.b32.xlu0 %v411, 12
      %v427 = vpop.permute.xlu0 %426
      %v429 = vunpack.c.l.b16 %v185
      %v430 = vpack.c.b16 %v429, %v429
      %v432 = vshrl.u32 %v411, 16
      %v434 = vshll.u32 %v411, 16
      %v436 = vrot.slane %v434, 1
      %v437 = vor.u32 %v432, %v436
      %v439 = vshll.u32 %v430, 16
      %v441 = vrot.slane %v439, 1
      %v442 = vsel %vm253, %v437, %v441
      %443 = vrot.lane.b32.xlu0 %v277, 16
      %v444 = vpop.permute.xlu0 %443
      %445 = vrot.lane.b32.xlu0 %v289, 16
      %v446 = vpop.permute.xlu0 %445
      %447 = vrot.lane.b32.xlu0 %v301, 16
      %v448 = vpop.permute.xlu0 %447
      %449 = vrot.lane.b32.xlu0 %v313, 16
      %v450 = vpop.permute.xlu0 %449
      %451 = vrot.lane.b32.xlu0 %v325, 16
      %v452 = vpop.permute.xlu0 %451
      %453 = vrot.lane.b32.xlu0 %v337, 16
      %v454 = vpop.permute.xlu0 %453
      %455 = vrot.lane.b32.xlu0 %v349, 16
      %v456 = vpop.permute.xlu0 %455
      %457 = vrot.lane.b32.xlu0 %v442, 16
      %v458 = vpop.permute.xlu0 %457
      %v459 = vrot.slane %v411, 1
      %v460 = vrot.slane %v430, 1
      %v461 = vsel %vm366, %v459, %v460
      %462 = vrot.lane.b32.xlu0 %v372, 20
      %v463 = vpop.permute.xlu0 %462
      %464 = vrot.lane.b32.xlu0 %v375, 20
      %v465 = vpop.permute.xlu0 %464
      %466 = vrot.lane.b32.xlu0 %v378, 20
      %v467 = vpop.permute.xlu0 %466
      %468 = vrot.lane.b32.xlu0 %v381, 20
      %v469 = vpop.permute.xlu0 %468
      %470 = vrot.lane.b32.xlu0 %v384, 20
      %v471 = vpop.permute.xlu0 %470
      %472 = vrot.lane.b32.xlu0 %v387, 20
      %v473 = vpop.permute.xlu0 %472
      %474 = vrot.lane.b32.xlu0 %v390, 20
      %v475 = vpop.permute.xlu0 %474
      %476 = vrot.lane.b32.xlu0 %v461, 20
      %v477 = vpop.permute.xlu0 %476
      %v480 = vunpack.c.l.b16 %v186
      %v481 = vunpack.c.l.b16 %v187
      %v482 = vpack.c.b16 %v481, %v480
      %483 = vrot.lane.b32.xlu0 %v223, 24
      %v484 = vpop.permute.xlu0 %483
      %485 = vrot.lane.b32.xlu0 %v224, 24
      %v486 = vpop.permute.xlu0 %485
      %487 = vrot.lane.b32.xlu0 %v225, 24
      %v488 = vpop.permute.xlu0 %487
      %489 = vrot.lane.b32.xlu0 %v226, 24
      %v490 = vpop.permute.xlu0 %489
      %491 = vrot.lane.b32.xlu0 %v227, 24
      %v492 = vpop.permute.xlu0 %491
      %493 = vrot.lane.b32.xlu0 %v228, 24
      %v494 = vpop.permute.xlu0 %493
      %495 = vrot.lane.b32.xlu0 %v411, 24
      %v496 = vpop.permute.xlu0 %495
      %497 = vrot.lane.b32.xlu0 %v482, 24
      %v498 = vpop.permute.xlu0 %497
      %v500 = vunpack.c.l.b16 %v188
      %v501 = vpack.c.b16 %v500, %v500
      %v503 = vshrl.u32 %v482, 16
      %v505 = vshll.u32 %v482, 16
      %v507 = vrot.slane %v505, 1
      %v508 = vor.u32 %v503, %v507
      %v510 = vshll.u32 %v501, 16
      %v512 = vrot.slane %v510, 1
      %v513 = vsel %vm253, %v508, %v512
      %514 = vrot.lane.b32.xlu0 %v289, 28
      %v515 = vpop.permute.xlu0 %514
      %516 = vrot.lane.b32.xlu0 %v301, 28
      %v517 = vpop.permute.xlu0 %516
      %518 = vrot.lane.b32.xlu0 %v313, 28
      %v519 = vpop.permute.xlu0 %518
      %520 = vrot.lane.b32.xlu0 %v325, 28
      %v521 = vpop.permute.xlu0 %520
      %522 = vrot.lane.b32.xlu0 %v337, 28
      %v523 = vpop.permute.xlu0 %522
      %524 = vrot.lane.b32.xlu0 %v349, 28
      %v525 = vpop.permute.xlu0 %524
      %526 = vrot.lane.b32.xlu0 %v442, 28
      %v527 = vpop.permute.xlu0 %526
      %528 = vrot.lane.b32.xlu0 %v513, 28
      %v529 = vpop.permute.xlu0 %528
      %v530 = vrot.slane %v482, 1
      %v531 = vrot.slane %v501, 1
      %v532 = vsel %vm366, %v530, %v531
      %533 = vrot.lane.b32.xlu0 %v375, 32
      %v534 = vpop.permute.xlu0 %533
      %535 = vrot.lane.b32.xlu0 %v378, 32
      %v536 = vpop.permute.xlu0 %535
      %537 = vrot.lane.b32.xlu0 %v381, 32
      %v538 = vpop.permute.xlu0 %537
      %539 = vrot.lane.b32.xlu0 %v384, 32
      %v540 = vpop.permute.xlu0 %539
      %541 = vrot.lane.b32.xlu0 %v387, 32
      %v542 = vpop.permute.xlu0 %541
      %543 = vrot.lane.b32.xlu0 %v390, 32
      %v544 = vpop.permute.xlu0 %543
      %545 = vrot.lane.b32.xlu0 %v461, 32
      %v546 = vpop.permute.xlu0 %545
      %547 = vrot.lane.b32.xlu0 %v532, 32
      %v548 = vpop.permute.xlu0 %547
      %vm549 = vcmask 31744
      %v551 = vsel %vm549, %v221, %v351
      %v553 = vsel %vm549, %v222, %v353
      %v555 = vsel %vm549, %v223, %v355
      %v557 = vsel %vm549, %v224, %v357
      %v559 = vsel %vm549, %v225, %v359
      %v561 = vsel %vm549, %v226, %v361
      %v563 = vsel %vm549, %v227, %v363
      %v565 = vsel %vm549, %v228, %v365
      %vm566 = vcmask 64512
      %v568 = vsel %vm566, %v551, %v392
      %v570 = vsel %vm566, %v553, %v394
      %v572 = vsel %vm566, %v555, %v396
      %v574 = vsel %vm566, %v557, %v398
      %v576 = vsel %vm566, %v559, %v400
      %v578 = vsel %vm566, %v561, %v402
      %v580 = vsel %vm566, %v563, %v404
      %v582 = vsel %vm566, %v565, %v406
      %vm583 = vcmask 97280
      %v585 = vsel %vm583, %v568, %v413
      %v587 = vsel %vm583, %v570, %v415
      %v589 = vsel %vm583, %v572, %v417
      %v591 = vsel %vm583, %v574, %v419
      %v593 = vsel %vm583, %v576, %v421
      %v595 = vsel %vm583, %v578, %v423
      %v597 = vsel %vm583, %v580, %v425
      %v599 = vsel %vm583, %v582, %v427
      %vm600 = vcmask 130048
      %v602 = vsel %vm600, %v585, %v444
      %v604 = vsel %vm600, %v587, %v446
      %v606 = vsel %vm600, %v589, %v448
      %v608 = vsel %vm600, %v591, %v450
      %v610 = vsel %vm600, %v593, %v452
      %v612 = vsel %vm600, %v595, %v454
      %v614 = vsel %vm600, %v597, %v456
      %v616 = vsel %vm600, %v599, %v458
      %vm617 = vcmask 162816
      %v619 = vsel %vm617, %v602, %v463
      %v621 = vsel %vm617, %v604, %v465
      %v623 = vsel %vm617, %v606, %v467
      %v625 = vsel %vm617, %v608, %v469
      %v627 = vsel %vm617, %v610, %v471
      %v629 = vsel %vm617, %v612, %v473
      %v631 = vsel %vm617, %v614, %v475
      %v633 = vsel %vm617, %v616, %v477
      %vm634 = vcmask 195584
      %v636 = vsel %vm634, %v619, %v484
      %v638 = vsel %vm634, %v621, %v486
      %v640 = vsel %vm634, %v623, %v488
      %v642 = vsel %vm634, %v625, %v490
      %v644 = vsel %vm634, %v627, %v492
      %v646 = vsel %vm634, %v629, %v494
      %v648 = vsel %vm634, %v631, %v496
      %v650 = vsel %vm634, %v633, %v498
      %vm651 = vcmask 228352
      %v653 = vsel %vm651, %v636, %v515
      %v655 = vsel %vm651, %v638, %v517
      %v657 = vsel %vm651, %v640, %v519
      %v659 = vsel %vm651, %v642, %v521
      %v661 = vsel %vm651, %v644, %v523
      %v663 = vsel %vm651, %v646, %v525
      %v665 = vsel %vm651, %v648, %v527
      %v667 = vsel %vm651, %v650, %v529
      %vm668 = vcmask 261120
      %v670 = vsel %vm668, %v653, %v534
      %v672 = vsel %vm668, %v655, %v536
      %v674 = vsel %vm668, %v657, %v538
      %v676 = vsel %vm668, %v659, %v540
      %v678 = vsel %vm668, %v661, %v542
      %v680 = vsel %vm668, %v663, %v544
      %v682 = vsel %vm668, %v665, %v546
      %v684 = vsel %vm668, %v667, %v548
      %v685 = vld [vmem:[%s1] sm:$0xf]
      %vm686 = vcmask 293888
      %v688 = vsel %vm686, %v685, 0
      %v690 = vsel %vm686, %v670, 0
      %v692 = vsel %vm686, %v672, 0
      %v694 = vsel %vm686, %v674, 0
      %v696 = vsel %vm686, %v676, 0
      %v698 = vsel %vm686, %v678, 0
      %v700 = vsel %vm686, %v680, 0
      %v702 = vsel %vm686, %v682, 0
      %v704 = vsel %vm686, %v684, 0
      %706 = vmatprep.subr.bf16.mxu0 0
      %707 = vmatpush1.bf16.xpose.msra.mxu0 %v690
      %708 = vmatprep.subr.bf16.mxu0 0
      %709 = vmatpush1.bf16.xpose.msra.mxu0 %v692
      %710 = vmatprep.subr.bf16.mxu0 0
      %711 = vmatpush1.bf16.xpose.msra.mxu0 %v694
      %712 = vmatprep.subr.bf16.mxu0 0
      %713 = vmatpush1.bf16.xpose.msra.mxu0 %v696
      %714 = vmatprep.subr.bf16.mxu0 0
      %715 = vmatpush1.bf16.xpose.msra.mxu0 %v698
      %716 = vmatprep.subr.bf16.mxu0 0
      %717 = vmatpush1.bf16.xpose.msra.mxu0 %v700
      %718 = vmatprep.subr.bf16.mxu0 0
      %719 = vmatpush1.bf16.xpose.msra.mxu0 %v702
      %720 = vmatprep.subr.bf16.mxu0 0
      %721 = vmatpush1.bf16.xpose.msra.mxu0 %v704
      %722 = vmatprep.subr.bf16.mxu0 0
      %723 = vmatpush1.bf16.xpose.msra.mxu0 0
      %724 = vmatprep.subr.bf16.mxu0 0
      %725 = vmatpush1.bf16.xpose.msra.mxu0 0
      %726 = vmatprep.subr.bf16.mxu0 0
      %727 = vmatpush1.bf16.xpose.msra.mxu0 0
      %728 = vmatprep.subr.bf16.mxu0 0
      %729 = vmatpush1.bf16.xpose.msra.mxu0 0
      %730 = vmatprep.subr.bf16.mxu0 0
      %731 = vmatpush1.bf16.xpose.msra.mxu0 0
      %732 = vmatprep.subr.bf16.mxu0 0
      %733 = vmatpush1.bf16.xpose.msra.mxu0 0
      %734 = vmatprep.subr.bf16.mxu0 0
      %735 = vmatpush1.bf16.xpose.msra.mxu0 0
      %736 = vmatprep.subr.bf16.mxu0 0
      %737 = vmatpush1.bf16.xpose.msra.mxu0 0
      %738 = vmatprep.mubr.bf16.mxu0 0
      %739 = vmatmul.mubr.bf16.gmra.mrb[0].mxu0 %v688
      %v740 = vpop.f32.mrb[0].mxu0
      %v741 = vadd.f32 0.0, %v740
      %v742 = vpop.f32.mrb[0].mxu0
      %v743 = vpop.f32.mrb[0].mxu0
      %v744 = vpop.f32.mrb[0].mxu0
      %745 = vdwg.mxu0
      %p746 = scmp.eq.s32.totalorder %s18, 0
      // Predicated region
      $region29: #{conv_layer_forward.2} parent=27 // pred_check
        %p747 = pneg %p746
      $region30: #{conv_layer_forward.2} parent=27 // pred_check_branch
        %749 = sbr.rel (%p747) target = $region32
      $region31: #{conv_layer_forward.2} parent=27 // pred_region
        %vm750 = vcmask 15360
        %751 = vst.msk [vmem:[%s153] sm:$0xff] %vm750, 0.0
      $region32: #{conv_layer_forward.2} parent=27 // pred_fallthru
        _
      %v752 = vld [vmem:[%s153] sm:$0xff]
      %753 = vadd.xlane.f32.xlu0 %v741
      %v754 = vpop.xlane.xlu0 %753
      %v755 = vadd.f32 %v752, %v754
      %vm756 = vcmask 7168
      %757 = vst.msk [vmem:[%s153] sm:$0xff] %vm756, %v755
      %v758 = vld [vmem:[%s153] sm:$0xff]
      %v759 = vmul.f32 %v741, %v741
      %760 = vadd.xlane.f32.xlu0 %v759
      %v761 = vpop.xlane.xlu0 %760
      %v762 = vadd.f32 %v758, %v761
      %vm763 = vcmask 15368
      %764 = vst.msk [vmem:[%s153] sm:$0xff] %vm763, %v762
      %p765 = scmp.lt.s32.totalorder %s17, 1
      %s766 = scalar_select %p765, %s17, 1
      %s767 = smul.addr %s766, 8
      %s768 = scalar_lea.vmem %s2, %s767
      // Predicated region
      $region33: #{conv_layer_forward.2} parent=27 // pred_check
        %p769 = pneg %p90
      $region34: #{conv_layer_forward.2} parent=27 // pred_check_branch
        %771 = sbr.rel (%p769) target = $region36
      $region35: #{conv_layer_forward.2} parent=27 // pred_region
        _
      $region36: #{conv_layer_forward.2} parent=27 // pred_fallthru
        _
    $region28: #{conv_layer_forward.2} parent=5 // pred_fallthru
      _
    %p772 = scmp.le.s32.totalorder 2, %s8
    // Predicated region
    $region37: #{conv_layer_forward.2} parent=5 // pred_check
      %p773 = pneg %p772
    $region38: #{conv_layer_forward.2} parent=5 // pred_check_branch
      %775 = sbr.rel (%p773) target = $region40
    $region39: #{conv_layer_forward.2} parent=5 // pred_region
      %s776 = ssub.s32 %s8, 2
      // Predicated region
      $region41: #{conv_layer_forward.2} parent=39 // pred_check
        %p777 = pneg %p96
      $region42: #{conv_layer_forward.2} parent=39 // pred_check_branch
        %779 = sbr.rel (%p777) target = $region44
      $region43: #{conv_layer_forward.2} parent=39 // pred_region
        %p780 = scmp.lt.s32.totalorder %s19, 1
        %s781 = scalar_select %p780, %s19, 1
        %s782 = smul.addr %s781, 8
        %s783 = scalar_lea.vmem %s2, %s782
      $region44: #{conv_layer_forward.2} parent=39 // pred_fallthru
        _
    $region40: #{conv_layer_forward.2} parent=5 // pred_fallthru
      _
  $region6: #{conv_layer_forward.2} parent=0 // loop_footer
    %s12 = sadd.s32 1, %s8
  $region7: #{conv_layer_forward.2} parent=0 // loop_footer_branch
    %7 = sbr.rel target = $region3
  $region8: #{conv_layer_forward.2} parent=0 // loop_exit
    _

</llo_original>
